<compile_context>
chip_gen: v7x
topology: tpu7x:2x2x1
jax: 0.10.0
libtpu: 0.0.40
codegen_flags: <defaults>
</compile_context>

<pallas_src>
import jax
import jax.numpy as jnp
from jax import lax
from jax.experimental import pallas as pl
from jax.experimental.pallas import tpu as pltpu


def _sepconv_kernel(x_ref, wdw_ref, bdw_ref, wpw_ref, bpw_ref, o_ref, xp_ref):
    # x_ref  : (NB, H,  W,  Cin)   unpadded NHWC activation block
    # wdw_ref: (K, K, Cin)         depthwise weights
    # bdw_ref: (1, Cin)            depthwise bias
    # wpw_ref: (Cout, Cin)         pointwise weights (channel-major)
    # bpw_ref: (Cout, 1)           pointwise bias
    # o_ref  : (Cout, NB*Ho*Wo)    lane-dense output slab
    # xp_ref : (NB, Hp, Wp, Cin)   VMEM scratch: zero-padded input (halo buffer)
    NB, H, W, Cin = x_ref.shape
    Hp, Wp = xp_ref.shape[1], xp_ref.shape[2]
    K = wdw_ref.shape[0]
    Ho, Wo = Hp - K + 1, Wp - K + 1
    ph, pw = (Hp - H) // 2, (Wp - W) // 2

    # Zero-pad inside VMEM (no padded activation copy in HBM). Re-zeroed every step so it
    # stays correct however the "parallel" grid axis is sharded across TensorCores.
    xp_ref[...] = jnp.zeros(xp_ref.shape, xp_ref.dtype)
    xp_ref[:, ph:ph + H, pw:pw + W, :] = x_ref[...]

    wdw = wdw_ref[...].astype(jnp.float32)      # (K, K, Cin)
    bdw = bdw_ref[0].astype(jnp.float32)        # (Cin,)

    # Only K sublane-offset slices along W; the ki slices below are along the untiled
    # H (major) axis and are free vreg selections.
    xw = [xp_ref[:, :, kj:kj + Wo, :].astype(jnp.float32) for kj in range(K)]

    # Depthwise conv: sum of K*K shifted windows, per-channel scaled (VPU work).
    acc = None                                   # init from first product (no zeros+add)
    for ki in range(K):
        for kj in range(K):
            term = xw[kj][:, ki:ki + Ho, :, :] * wdw[ki, kj]
            acc = term if acc is None else acc + term
    acc = acc + bdw                              # (NB, Ho, Wo, Cin)

    # Pointwise 1x1 conv: one MXU matmul, transposed so the result (Cout, NB*Ho*Wo)
    # is lane dense -> full-width stores and a contiguous output DMA.
    acc2 = acc.reshape(NB * Ho * Wo, Cin)        # free view when Wo % 8 == 0
    y = lax.dot_general(
        wpw_ref[...].astype(jnp.float32), acc2,
        dimension_numbers=(((1,), (1,)), ((), ())),
        preferred_element_type=jnp.float32)      # (Cout, NB*Ho*Wo)
    y = y + bpw_ref[...].astype(jnp.float32)     # (Cout, 1) broadcast
    o_ref[...] = y.astype(o_ref.dtype)


def _pick_block_n(n, hw, target_rows=512):
    """Images per grid step: keep the output slab lane-aligned (multiple of 128 columns),
    keep >= 2 grid steps (pipelining / megacore), and aim for ~512 matmul rows."""
    best = n
    for d in range(1, n + 1):
        if n % d:
            continue
        if (d * hw) % 128 != 0 and d != n:   # d == n: block equals full dim, always legal
            continue
        if n // d >= 2 and d * hw <= target_rows:
            best = d
    return best


def synapse_separable_conv(x, w_dw, b_dw, w_pw, b_pw, *, padding=1, block_n=None):
    """x: (T, B, Cin, H, W); w_dw: (Cin,1,K,K); b_dw: (Cin,);
    w_pw: (Cout, Cin, 1, 1); b_pw: (Cout,). Returns (T, B, Cout, Ho, Wo)."""
    T, B, Cin, H, W = x.shape
    Cout = w_pw.shape[0]
    K = w_dw.shape[-1]
    N = T * B
    Hp, Wp = H + 2 * padding, W + 2 * padding
    Ho, Wo = Hp - K + 1, Wp - K + 1
    # TODO(synk): stride > 1 not implemented (module default stride=1 is what's used here).

    # NCHW -> NHWC (fold T into batch). No spatial pad here: padding is done in VMEM.
    x_nhwc = jnp.transpose(x.reshape(N, Cin, H, W), (0, 2, 3, 1))     # (N, H, W, Cin)

    wdw_k = jnp.transpose(w_dw[:, 0, :, :], (1, 2, 0))                # (K, K, Cin)
    bdw_k = b_dw.reshape(1, Cin)
    wpw_k = w_pw[:, :, 0, 0]                                          # (Cout, Cin)
    bpw_k = b_pw.reshape(Cout, 1)

    nb = block_n if block_n is not None else _pick_block_n(N, Ho * Wo)
    assert N % nb == 0, (N, nb)
    grid = (N // nb,)

    out = pl.pallas_call(
        _sepconv_kernel,
        out_shape=jax.ShapeDtypeStruct((Cout, N * Ho * Wo), x.dtype),
        grid_spec=pltpu.PrefetchScalarGridSpec(
            num_scalar_prefetch=0,
            grid=grid,
            in_specs=[
                pl.BlockSpec((nb, H, W, Cin), lambda n: (n, 0, 0, 0)),
                pl.BlockSpec((K, K, Cin), lambda n: (0, 0, 0)),
                pl.BlockSpec((1, Cin), lambda n: (0, 0)),
                pl.BlockSpec((Cout, Cin), lambda n: (0, 0)),
                pl.BlockSpec((Cout, 1), lambda n: (0, 0)),
            ],
            out_specs=pl.BlockSpec((Cout, nb * Ho * Wo), lambda n: (0, n)),
            scratch_shapes=[pltpu.VMEM((nb, Hp, Wp, Cin), x.dtype)],
        ),
        compiler_params=pltpu.CompilerParams(
            dimension_semantics=("parallel",),
            vmem_limit_bytes=32 * 1024 * 1024,
        ),
    )(x_nhwc, wdw_k, bdw_k, wpw_k, bpw_k)

    # (Cout, N*Ho*Wo) -> (T, B, Cout, Ho, Wo): the same single transpose pass that the
    # NHWC->NCHW conversion required before.
    out = out.reshape(Cout, T, B, Ho, Wo)
    out = jnp.transpose(out, (1, 2, 0, 3, 4))
    return out


def _reference(x, w_dw, b_dw, w_pw, b_pw, *, padding=1):
    T, B, Cin, H, W = x.shape
    xr = x.reshape(T * B, Cin, H, W)
    y = lax.conv_general_dilated(
        xr, w_dw, window_strides=(1, 1),
        padding=((padding, padding), (padding, padding)),
        dimension_numbers=("NCHW", "OIHW", "NCHW"),
        feature_group_count=Cin)
    y = y + b_dw[None, :, None, None]
    z = lax.conv_general_dilated(
        y, w_pw, window_strides=(1, 1), padding="VALID",
        dimension_numbers=("NCHW", "OIHW", "NCHW"))
    z = z + b_pw[None, :, None, None]
    return z.reshape(T, B, -1, H, W)


if __name__ == "__main__":
    T, B, Cin, Cout, H, W, K = 8, 2, 4, 8, 16, 16, 3
    key = jax.random.PRNGKey(0)
    kx, k1, k2, k3, k4 = jax.random.split(key, 5)

    x = jax.random.normal(kx, (T, B, Cin, H, W), dtype=jnp.float32)
    # Deterministic parameter init (shapes match nn.Conv2d in the module).
    w_dw = jax.random.normal(k1, (Cin, 1, K, K), dtype=jnp.float32) * 0.1
    b_dw = jax.random.normal(k2, (Cin,), dtype=jnp.float32) * 0.1
    w_pw = jax.random.normal(k3, (Cout, Cin, 1, 1), dtype=jnp.float32) * 0.1
    b_pw = jax.random.normal(k4, (Cout,), dtype=jnp.float32) * 0.1

    out = synapse_separable_conv(x, w_dw, b_dw, w_pw, b_pw, padding=1)
    out = jax.block_until_ready(out)

    ref = jax.block_until_ready(_reference(x, w_dw, b_dw, w_pw, b_pw, padding=1))
    assert out.shape == (T, B, Cout, H, W), out.shape
    assert jnp.allclose(out, ref, atol=1e-5, rtol=1e-5)
    print("KERNEL_OK")
</pallas_src>

<mosaic_0001>
module attributes {stable_mosaic.version = 11 : i64} {
  func.func @_sepconv_kernel(%arg0: i32, %arg1: memref<2x16x16x4xf32, #tpu.memory_space<vmem>>, %arg2: memref<3x3x4xf32, #tpu.memory_space<vmem>>, %arg3: memref<1x4xf32, #tpu.memory_space<vmem>>, %arg4: memref<8x4xf32, #tpu.memory_space<vmem>>, %arg5: memref<8x1xf32, #tpu.memory_space<vmem>>, %arg6: memref<8x512xf32, #tpu.memory_space<vmem>>, %arg7: memref<2x18x18x4xf32, #tpu.memory_space<vmem>>) attributes {dimension_semantics = [#tpu.dimension_semantics<parallel>], iteration_bounds = array<i64: 8>, scalar_prefetch = 0 : i64, scratch_operands = 1 : i64, tpu.core_type = #tpu.core_type<tc>, window_params = [{transform_indices = @transform_0, window_bounds = array<i64: 2, 16, 16, 4>}, {pipeline_mode = #tpu.pipeline_mode<synchronous>, transform_indices = @transform_1, window_bounds = array<i64: 3, 3, 4>}, {pipeline_mode = #tpu.pipeline_mode<synchronous>, transform_indices = @transform_2, window_bounds = array<i64: 1, 4>}, {pipeline_mode = #tpu.pipeline_mode<synchronous>, transform_indices = @transform_3, window_bounds = array<i64: 8, 4>}, {pipeline_mode = #tpu.pipeline_mode<synchronous>, transform_indices = @transform_4, window_bounds = array<i64: 8, 1>}, {transform_indices = @transform_5, window_bounds = array<i64: 8, 512>}]} {
    %cst = arith.constant 0.000000e+00 : f32
    %0 = vector.broadcast %cst : f32 to vector<2x18x18x4xf32>
    %c0 = arith.constant 0 : index
    %c0_0 = arith.constant 0 : index
    %c0_1 = arith.constant 0 : index
    %c0_2 = arith.constant 0 : index
    %1 = vector.load %arg7[%c0, %c0_0, %c0_1, %c0_2] : memref<2x18x18x4xf32, #tpu.memory_space<vmem>>, vector<2x18x18x4xf32>
    tpu.vector_store %arg7[%c0, %c0_0, %c0_1, %c0_2], %0 {strides = array<i32>} : memref<2x18x18x4xf32, #tpu.memory_space<vmem>>, vector<2x18x18x4xf32>,
    %c0_3 = arith.constant 0 : index
    %c0_4 = arith.constant 0 : index
    %c0_5 = arith.constant 0 : index
    %c0_6 = arith.constant 0 : index
    %2 = vector.load %arg1[%c0_3, %c0_4, %c0_5, %c0_6] : memref<2x16x16x4xf32, #tpu.memory_space<vmem>>, vector<2x16x16x4xf32>
    %c0_7 = arith.constant 0 : index
    %c1 = arith.constant 1 : index
    %c1_8 = arith.constant 1 : index
    %c0_9 = arith.constant 0 : index
    %3 = vector.load %arg7[%c0_7, %c1, %c1_8, %c0_9] : memref<2x18x18x4xf32, #tpu.memory_space<vmem>>, vector<2x16x16x4xf32>
    tpu.vector_store %arg7[%c0_7, %c1, %c1_8, %c0_9], %2 {strides = array<i32>} : memref<2x18x18x4xf32, #tpu.memory_space<vmem>>, vector<2x16x16x4xf32>,
    %c0_10 = arith.constant 0 : index
    %c0_11 = arith.constant 0 : index
    %c0_12 = arith.constant 0 : index
    %4 = vector.load %arg2[%c0_10, %c0_11, %c0_12] : memref<3x3x4xf32, #tpu.memory_space<vmem>>, vector<3x3x4xf32>
    %c0_13 = arith.constant 0 : index
    %c0_14 = arith.constant 0 : index
    %5 = vector.load %arg3[%c0_13, %c0_14] : memref<1x4xf32, #tpu.memory_space<vmem>>, vector<1x4xf32>
    %6 = vector.shape_cast %5 : vector<1x4xf32> to vector<4xf32>
    %c0_15 = arith.constant 0 : index
    %c0_16 = arith.constant 0 : index
    %c0_17 = arith.constant 0 : index
    %c0_18 = arith.constant 0 : index
    %7 = vector.load %arg7[%c0_15, %c0_16, %c0_17, %c0_18] : memref<2x18x18x4xf32, #tpu.memory_space<vmem>>, vector<2x18x16x4xf32>
    %c0_19 = arith.constant 0 : index
    %c0_20 = arith.constant 0 : index
    %c1_21 = arith.constant 1 : index
    %c0_22 = arith.constant 0 : index
    %8 = vector.load %arg7[%c0_19, %c0_20, %c1_21, %c0_22] : memref<2x18x18x4xf32, #tpu.memory_space<vmem>>, vector<2x18x16x4xf32>
    %c0_23 = arith.constant 0 : index
    %c0_24 = arith.constant 0 : index
    %c2 = arith.constant 2 : index
    %c0_25 = arith.constant 0 : index
    %9 = vector.load %arg7[%c0_23, %c0_24, %c2, %c0_25] : memref<2x18x18x4xf32, #tpu.memory_space<vmem>>, vector<2x18x16x4xf32>
    %10 = vector.extract_strided_slice %7 {offsets = [0, 0, 0, 0], sizes = [2, 16, 16, 4], strides = [1, 1, 1, 1]} : vector<2x18x16x4xf32> to vector<2x16x16x4xf32>
    %11 = vector.extract_strided_slice %4 {offsets = [0, 0, 0], sizes = [1, 1, 4], strides = [1, 1, 1]} : vector<3x3x4xf32> to vector<1x1x4xf32>
    %12 = vector.shape_cast %11 : vector<1x1x4xf32> to vector<4xf32>
    %13 = vector.shape_cast %12 : vector<4xf32> to vector<1x1x1x4xf32>
    %14 = vector.broadcast %13 : vector<1x1x1x4xf32> to vector<2x16x16x4xf32>
    %15 = arith.mulf %10, %14 : vector<2x16x16x4xf32>
    %16 = vector.extract_strided_slice %8 {offsets = [0, 0, 0, 0], sizes = [2, 16, 16, 4], strides = [1, 1, 1, 1]} : vector<2x18x16x4xf32> to vector<2x16x16x4xf32>
    %17 = vector.extract_strided_slice %4 {offsets = [0, 1, 0], sizes = [1, 1, 4], strides = [1, 1, 1]} : vector<3x3x4xf32> to vector<1x1x4xf32>
    %18 = vector.shape_cast %17 : vector<1x1x4xf32> to vector<4xf32>
    %19 = vector.shape_cast %18 : vector<4xf32> to vector<1x1x1x4xf32>
    %20 = vector.broadcast %19 : vector<1x1x1x4xf32> to vector<2x16x16x4xf32>
    %21 = arith.mulf %16, %20 : vector<2x16x16x4xf32>
    %22 = arith.addf %15, %21 : vector<2x16x16x4xf32>
    %23 = vector.extract_strided_slice %9 {offsets = [0, 0, 0, 0], sizes = [2, 16, 16, 4], strides = [1, 1, 1, 1]} : vector<2x18x16x4xf32> to vector<2x16x16x4xf32>
    %24 = vector.extract_strided_slice %4 {offsets = [0, 2, 0], sizes = [1, 1, 4], strides = [1, 1, 1]} : vector<3x3x4xf32> to vector<1x1x4xf32>
    %25 = vector.shape_cast %24 : vector<1x1x4xf32> to vector<4xf32>
    %26 = vector.shape_cast %25 : vector<4xf32> to vector<1x1x1x4xf32>
    %27 = vector.broadcast %26 : vector<1x1x1x4xf32> to vector<2x16x16x4xf32>
    %28 = arith.mulf %23, %27 : vector<2x16x16x4xf32>
    %29 = arith.addf %22, %28 : vector<2x16x16x4xf32>
    %30 = vector.extract_strided_slice %7 {offsets = [0, 1, 0, 0], sizes = [2, 16, 16, 4], strides = [1, 1, 1, 1]} : vector<2x18x16x4xf32> to vector<2x16x16x4xf32>
    %31 = vector.extract_strided_slice %4 {offsets = [1, 0, 0], sizes = [1, 1, 4], strides = [1, 1, 1]} : vector<3x3x4xf32> to vector<1x1x4xf32>
    %32 = vector.shape_cast %31 : vector<1x1x4xf32> to vector<4xf32>
    %33 = vector.shape_cast %32 : vector<4xf32> to vector<1x1x1x4xf32>
    %34 = vector.broadcast %33 : vector<1x1x1x4xf32> to vector<2x16x16x4xf32>
    %35 = arith.mulf %30, %34 : vector<2x16x16x4xf32>
    %36 = arith.addf %29, %35 : vector<2x16x16x4xf32>
    %37 = vector.extract_strided_slice %8 {offsets = [0, 1, 0, 0], sizes = [2, 16, 16, 4], strides = [1, 1, 1, 1]} : vector<2x18x16x4xf32> to vector<2x16x16x4xf32>
    %38 = vector.extract_strided_slice %4 {offsets = [1, 1, 0], sizes = [1, 1, 4], strides = [1, 1, 1]} : vector<3x3x4xf32> to vector<1x1x4xf32>
    %39 = vector.shape_cast %38 : vector<1x1x4xf32> to vector<4xf32>
    %40 = vector.shape_cast %39 : vector<4xf32> to vector<1x1x1x4xf32>
    %41 = vector.broadcast %40 : vector<1x1x1x4xf32> to vector<2x16x16x4xf32>
    %42 = arith.mulf %37, %41 : vector<2x16x16x4xf32>
    %43 = arith.addf %36, %42 : vector<2x16x16x4xf32>
    %44 = vector.extract_strided_slice %9 {offsets = [0, 1, 0, 0], sizes = [2, 16, 16, 4], strides = [1, 1, 1, 1]} : vector<2x18x16x4xf32> to vector<2x16x16x4xf32>
    %45 = vector.extract_strided_slice %4 {offsets = [1, 2, 0], sizes = [1, 1, 4], strides = [1, 1, 1]} : vector<3x3x4xf32> to vector<1x1x4xf32>
    %46 = vector.shape_cast %45 : vector<1x1x4xf32> to vector<4xf32>
    %47 = vector.shape_cast %46 : vector<4xf32> to vector<1x1x1x4xf32>
    %48 = vector.broadcast %47 : vector<1x1x1x4xf32> to vector<2x16x16x4xf32>
    %49 = arith.mulf %44, %48 : vector<2x16x16x4xf32>
    %50 = arith.addf %43, %49 : vector<2x16x16x4xf32>
    %51 = vector.extract_strided_slice %7 {offsets = [0, 2, 0, 0], sizes = [2, 16, 16, 4], strides = [1, 1, 1, 1]} : vector<2x18x16x4xf32> to vector<2x16x16x4xf32>
    %52 = vector.extract_strided_slice %4 {offsets = [2, 0, 0], sizes = [1, 1, 4], strides = [1, 1, 1]} : vector<3x3x4xf32> to vector<1x1x4xf32>
    %53 = vector.shape_cast %52 : vector<1x1x4xf32> to vector<4xf32>
    %54 = vector.shape_cast %53 : vector<4xf32> to vector<1x1x1x4xf32>
    %55 = vector.broadcast %54 : vector<1x1x1x4xf32> to vector<2x16x16x4xf32>
    %56 = arith.mulf %51, %55 : vector<2x16x16x4xf32>
    %57 = arith.addf %50, %56 : vector<2x16x16x4xf32>
    %58 = vector.extract_strided_slice %8 {offsets = [0, 2, 0, 0], sizes = [2, 16, 16, 4], strides = [1, 1, 1, 1]} : vector<2x18x16x4xf32> to vector<2x16x16x4xf32>
    %59 = vector.extract_strided_slice %4 {offsets = [2, 1, 0], sizes = [1, 1, 4], strides = [1, 1, 1]} : vector<3x3x4xf32> to vector<1x1x4xf32>
    %60 = vector.shape_cast %59 : vector<1x1x4xf32> to vector<4xf32>
    %61 = vector.shape_cast %60 : vector<4xf32> to vector<1x1x1x4xf32>
    %62 = vector.broadcast %61 : vector<1x1x1x4xf32> to vector<2x16x16x4xf32>
    %63 = arith.mulf %58, %62 : vector<2x16x16x4xf32>
    %64 = arith.addf %57, %63 : vector<2x16x16x4xf32>
    %65 = vector.extract_strided_slice %9 {offsets = [0, 2, 0, 0], sizes = [2, 16, 16, 4], strides = [1, 1, 1, 1]} : vector<2x18x16x4xf32> to vector<2x16x16x4xf32>
    %66 = vector.extract_strided_slice %4 {offsets = [2, 2, 0], sizes = [1, 1, 4], strides = [1, 1, 1]} : vector<3x3x4xf32> to vector<1x1x4xf32>
    %67 = vector.shape_cast %66 : vector<1x1x4xf32> to vector<4xf32>
    %68 = vector.shape_cast %67 : vector<4xf32> to vector<1x1x1x4xf32>
    %69 = vector.broadcast %68 : vector<1x1x1x4xf32> to vector<2x16x16x4xf32>
    %70 = arith.mulf %65, %69 : vector<2x16x16x4xf32>
    %71 = arith.addf %64, %70 : vector<2x16x16x4xf32>
    %72 = vector.shape_cast %6 : vector<4xf32> to vector<1x1x1x4xf32>
    %73 = vector.broadcast %72 : vector<1x1x1x4xf32> to vector<2x16x16x4xf32>
    %74 = arith.addf %71, %73 : vector<2x16x16x4xf32>
    %75 = vector.shape_cast %74 : vector<2x16x16x4xf32> to vector<512x4xf32>
    %c0_26 = arith.constant 0 : index
    %c0_27 = arith.constant 0 : index
    %76 = vector.load %arg4[%c0_26, %c0_27] : memref<8x4xf32, #tpu.memory_space<vmem>>, vector<8x4xf32>
    %cst_28 = arith.constant dense<0.000000e+00> : vector<8x512xf32>
    %77 = tpu.matmul %76, %75, %cst_28 {dimension_numbers = #tpu.dot_dimension_numbers<[1], [1], [0], [0], [0, 0, 1, 0], [], []>} : vector<8x4xf32>, vector<512x4xf32>, vector<8x512xf32> -> vector<8x512xf32>
    %c0_29 = arith.constant 0 : index
    %c0_30 = arith.constant 0 : index
    %78 = vector.load %arg5[%c0_29, %c0_30] : memref<8x1xf32, #tpu.memory_space<vmem>>, vector<8x1xf32>
    %79 = vector.broadcast %78 : vector<8x1xf32> to vector<8x512xf32>
    %80 = arith.addf %77, %79 : vector<8x512xf32>
    %c0_31 = arith.constant 0 : index
    %c0_32 = arith.constant 0 : index
    %81 = vector.load %arg6[%c0_31, %c0_32] : memref<8x512xf32, #tpu.memory_space<vmem>>, vector<8x512xf32>
    tpu.vector_store %arg6[%c0_31, %c0_32], %80 {strides = array<i32>} : memref<8x512xf32, #tpu.memory_space<vmem>>, vector<8x512xf32>,
    return
  }
  func.func @transform_0(%arg0: i32) -> (i32, i32, i32, i32) {
    %c0_i32 = arith.constant 0 : i32
    %c0_i32_0 = arith.constant 0 : i32
    %c0_i32_1 = arith.constant 0 : i32
    %c0_i32_2 = arith.constant 0 : i32
    return %arg0, %c0_i32, %c0_i32_0, %c0_i32_1 : i32, i32, i32, i32
  }
  func.func @transform_1(%arg0: i32) -> (i32, i32, i32) {
    %c0_i32 = arith.constant 0 : i32
    %c0_i32_0 = arith.constant 0 : i32
    %c0_i32_1 = arith.constant 0 : i32
    %c0_i32_2 = arith.constant 0 : i32
    return %c0_i32, %c0_i32_0, %c0_i32_1 : i32, i32, i32
  }
  func.func @transform_2(%arg0: i32) -> (i32, i32) {
    %c0_i32 = arith.constant 0 : i32
    %c0_i32_0 = arith.constant 0 : i32
    %c0_i32_1 = arith.constant 0 : i32
    return %c0_i32, %c0_i32_0 : i32, i32
  }
  func.func @transform_3(%arg0: i32) -> (i32, i32) {
    %c0_i32 = arith.constant 0 : i32
    %c0_i32_0 = arith.constant 0 : i32
    %c0_i32_1 = arith.constant 0 : i32
    return %c0_i32, %c0_i32_0 : i32, i32
  }
  func.func @transform_4(%arg0: i32) -> (i32, i32) {
    %c0_i32 = arith.constant 0 : i32
    %c0_i32_0 = arith.constant 0 : i32
    %c0_i32_1 = arith.constant 0 : i32
    return %c0_i32, %c0_i32_0 : i32, i32
  }
  func.func @transform_5(%arg0: i32) -> (i32, i32) {
    %c0_i32 = arith.constant 0 : i32
    %c0_i32_0 = arith.constant 0 : i32
    return %c0_i32, %arg0 : i32, i32
  }
}

</mosaic_0001>

<llo_original>
// kernel: tpu_custom_call.1
$region0: #{tpu_custom_call.1}
  #allocation0 [shape = 'u32[]', space=smem, size = 0x4, offset = 0x4, fixed_abs, tag = 'smem constant byte address 0x4 - core index']
  #allocation1 [shape = 'u32[144,128]{1,0:T(1,128)}', space=vmem, size = 0x12000, scoped, tag = 'internal scratch']
  #allocation2 [shape = 'f32[2,18,18,4]{3,2,1,0:T(8,128)}', space=vmem, size = 0x6c000, scoped, tag = 'scratch operand']
  %s0 = inlined_call_operand.vmem [shape: f32[16,16,16,4], index: 0, kind: input, shape index: {}]
  %s1 = inlined_call_operand.vmem [shape: f32[3,3,4], index: 1, kind: input, shape index: {}]
  %s2 = inlined_call_operand.vmem [shape: f32[1,4], index: 2, kind: input, shape index: {}]
  %s3 = inlined_call_operand.vmem [shape: f32[8,4], index: 3, kind: input, shape index: {}]
  %s4 = inlined_call_operand.vmem [shape: f32[8,1], index: 4, kind: input, shape index: {}]
  %s5 = inlined_call_operand.hbm [shape: f32[8,4096], index: 5, kind: output, shape index: {}]
  %s6 = sld [smem:[#allocation0]]
  $region53: #{tpu_custom_call.1} parent=0
    _
  %s8 = ssub.s32 1, %s6
  %s9 = scalar_select 0, %s8, %s6
  $region1: #{tpu_custom_call.1} parent=0
    #allocation3 [shape = 'u8[32768]{0}', space=vmem, size = 0x8000, scoped, tag = 'output window, operand 0']
    #allocation4 [shape = 's32[2]{0}', space=sflag, size = 0x8, scoped, tag = 'scoped memory for tpu_custom_call.1']
    %10 = vsyncpa [#allocation4], 0
    %s11 = scalar_lea.sflag [#allocation4], 1
    %12 = vsyncpa %s11, 0
    loop: start=0, step=1, limit=10
    $region2: #{tpu_custom_call.1} parent=1 // loop_pre_header
      _
    $region3: #{tpu_custom_call.1} parent=1 // loop_header
      %s14 = sphi 0, %s18
      %p15 = scmp.ge.s32.totalorder %s14, 10
      %s24 = sphi 0, %s26
      %s27 = sphi 0, %s24
      %s28 = sphi 0, %s27
      %s44 = sphi 0, %s28
      %s48 = sphi 0, %s48
      %s50 = sphi 0, %s48
      %s51 = sphi 0, %s50
      %s65 = sphi 0, %s51
      %s69 = sphi 0, %s69
      %s71 = sphi 0, %s69
      %s72 = sphi 0, %s71
      %s86 = sphi 0, %s72
      %s90 = sphi 0, %s90
      %s92 = sphi 0, %s90
      %s93 = sphi 0, %s92
      %s107 = sphi 0, %s93
      %s111 = sphi 0, %s111
      %s113 = sphi 0, %s111
      %s114 = sphi 0, %s113
      %s128 = sphi 0, %s114
      %s134 = sphi 0, %s136
      %s137 = sphi 0, %s134
      %s138 = sphi 0, %s137
      %s154 = sphi 0, %s138
    $region4: #{tpu_custom_call.1} parent=1 // loop_header_branch
      %17 = sbr.rel (%p15) target = $region8
    $region5: #{tpu_custom_call.1} parent=1 // loop_body
      %s19 = ssub.s32 %s14, 1
      %s20 = ssub.s32 %s14, 2
      %s21 = sadd.s32 %s14, 1
      %s22 = ssub.s32 %s14, %s21
      %p23 = scmp.eq.s32.totalorder %s22, 0
      %s25 = sadd.s32 %s24, 1
      %s26 = scalar_select %p23, %s24, %s25
      %p29 = pneg %p23
      %p30 = scmp.eq.s32.totalorder %s14, 7
      %p31 = por %p29, %p30
      %p32 = scmp.ne.s32.totalorder %s24, %s27
      %p33 = scmp.eq.s32.totalorder %s14, 0
      %p34 = por %p32, %p33
      %p35 = scmp.ne.s32.totalorder %s24, %s27
      %p36 = scmp.eq.s32.totalorder %s19, 7
      %p37 = por %p35, %p36
      %p38 = scmp.ne.s32.totalorder %s27, %s28
      %p39 = scmp.eq.s32.totalorder %s19, 0
      %p40 = por %p38, %p39
      %p41 = scmp.ne.s32.totalorder %s27, %s28
      %p42 = scmp.eq.s32.totalorder %s20, 7
      %p43 = por %p41, %p42
      %p45 = scmp.ne.s32.totalorder %s28, %s44
      %p46 = scmp.eq.s32.totalorder %s20, 0
      %p47 = por %p45, %p46
      %s49 = sadd.s32 %s48, 1
      %p52 = scmp.eq.s32.totalorder %s14, 7
      %p53 = scmp.ne.s32.totalorder %s48, %s50
      %p54 = scmp.eq.s32.totalorder %s14, 0
      %p55 = por %p53, %p54
      %p56 = scmp.ne.s32.totalorder %s48, %s50
      %p57 = scmp.eq.s32.totalorder %s19, 7
      %p58 = por %p56, %p57
      %p59 = scmp.ne.s32.totalorder %s50, %s51
      %p60 = scmp.eq.s32.totalorder %s19, 0
      %p61 = por %p59, %p60
      %p62 = scmp.ne.s32.totalorder %s50, %s51
      %p63 = scmp.eq.s32.totalorder %s20, 7
      %p64 = por %p62, %p63
      %p66 = scmp.ne.s32.totalorder %s51, %s65
      %p67 = scmp.eq.s32.totalorder %s20, 0
      %p68 = por %p66, %p67
      %s70 = sadd.s32 %s69, 1
      %p73 = scmp.eq.s32.totalorder %s14, 7
      %p74 = scmp.ne.s32.totalorder %s69, %s71
      %p75 = scmp.eq.s32.totalorder %s14, 0
      %p76 = por %p74, %p75
      %p77 = scmp.ne.s32.totalorder %s69, %s71
      %p78 = scmp.eq.s32.totalorder %s19, 7
      %p79 = por %p77, %p78
      %p80 = scmp.ne.s32.totalorder %s71, %s72
      %p81 = scmp.eq.s32.totalorder %s19, 0
      %p82 = por %p80, %p81
      %p83 = scmp.ne.s32.totalorder %s71, %s72
      %p84 = scmp.eq.s32.totalorder %s20, 7
      %p85 = por %p83, %p84
      %p87 = scmp.ne.s32.totalorder %s72, %s86
      %p88 = scmp.eq.s32.totalorder %s20, 0
      %p89 = por %p87, %p88
      %s91 = sadd.s32 %s90, 1
      %p94 = scmp.eq.s32.totalorder %s14, 7
      %p95 = scmp.ne.s32.totalorder %s90, %s92
      %p96 = scmp.eq.s32.totalorder %s14, 0
      %p97 = por %p95, %p96
      %p98 = scmp.ne.s32.totalorder %s90, %s92
      %p99 = scmp.eq.s32.totalorder %s19, 7
      %p100 = por %p98, %p99
      %p101 = scmp.ne.s32.totalorder %s92, %s93
      %p102 = scmp.eq.s32.totalorder %s19, 0
      %p103 = por %p101, %p102
      %p104 = scmp.ne.s32.totalorder %s92, %s93
      %p105 = scmp.eq.s32.totalorder %s20, 7
      %p106 = por %p104, %p105
      %p108 = scmp.ne.s32.totalorder %s93, %s107
      %p109 = scmp.eq.s32.totalorder %s20, 0
      %p110 = por %p108, %p109
      %s112 = sadd.s32 %s111, 1
      %p115 = scmp.eq.s32.totalorder %s14, 7
      %p116 = scmp.ne.s32.totalorder %s111, %s113
      %p117 = scmp.eq.s32.totalorder %s14, 0
      %p118 = por %p116, %p117
      %p119 = scmp.ne.s32.totalorder %s111, %s113
      %p120 = scmp.eq.s32.totalorder %s19, 7
      %p121 = por %p119, %p120
      %p122 = scmp.ne.s32.totalorder %s113, %s114
      %p123 = scmp.eq.s32.totalorder %s19, 0
      %p124 = por %p122, %p123
      %p125 = scmp.ne.s32.totalorder %s113, %s114
      %p126 = scmp.eq.s32.totalorder %s20, 7
      %p127 = por %p125, %p126
      %p129 = scmp.ne.s32.totalorder %s114, %s128
      %p130 = scmp.eq.s32.totalorder %s20, 0
      %p131 = por %p129, %p130
      %s132 = ssub.s32 %s14, %s21
      %p133 = scmp.eq.s32.totalorder %s132, 0
      %s135 = sadd.s32 %s134, 1
      %s136 = scalar_select %p133, %s134, %s135
      %p139 = pneg %p133
      %p140 = scmp.eq.s32.totalorder %s14, 7
      %p141 = por %p139, %p140
      %p142 = scmp.ne.s32.totalorder %s134, %s137
      %p143 = scmp.eq.s32.totalorder %s14, 0
      %p144 = por %p142, %p143
      %p145 = scmp.ne.s32.totalorder %s134, %s137
      %p146 = scmp.eq.s32.totalorder %s19, 7
      %p147 = por %p145, %p146
      %p148 = scmp.ne.s32.totalorder %s137, %s138
      %p149 = scmp.eq.s32.totalorder %s19, 0
      %p150 = por %p148, %p149
      %p151 = scmp.ne.s32.totalorder %s137, %s138
      %p152 = scmp.eq.s32.totalorder %s20, 7
      %p153 = por %p151, %p152
      %p155 = scmp.ne.s32.totalorder %s138, %s154
      %p156 = scmp.eq.s32.totalorder %s20, 0
      %p157 = por %p155, %p156
      %p158 = scmp.le.s32.totalorder 1, %s14
      %p159 = scmp.lt.s32.totalorder %s14, 9
      %p160 = pnand %p158, %p159
      %p161 = pneg %p160
      // Predicated region
      $region9: #{tpu_custom_call.1} parent=5 // pred_check
        _
      $region10: #{tpu_custom_call.1} parent=5 // pred_check_branch
        %163 = sbr.rel (%p160) target = $region12
      $region11: #{tpu_custom_call.1} parent=5 // pred_region
        %s164 = ssub.s32 %s14, 1
        // Predicated region
        $region13: #{tpu_custom_call.1} parent=11 // pred_check
          %p165 = pneg %p61
        $region14: #{tpu_custom_call.1} parent=11 // pred_check_branch
          %167 = sbr.rel (%p165) target = $region16
        $region15: #{tpu_custom_call.1} parent=11 // pred_region
          _
        $region16: #{tpu_custom_call.1} parent=11 // pred_fallthru
          _
        // Predicated region
        $region17: #{tpu_custom_call.1} parent=11 // pred_check
          %p168 = pneg %p82
        $region18: #{tpu_custom_call.1} parent=11 // pred_check_branch
          %170 = sbr.rel (%p168) target = $region20
        $region19: #{tpu_custom_call.1} parent=11 // pred_region
          _
        $region20: #{tpu_custom_call.1} parent=11 // pred_fallthru
          _
        // Predicated region
        $region21: #{tpu_custom_call.1} parent=11 // pred_check
          %p171 = pneg %p103
        $region22: #{tpu_custom_call.1} parent=11 // pred_check_branch
          %173 = sbr.rel (%p171) target = $region24
        $region23: #{tpu_custom_call.1} parent=11 // pred_region
          _
        $region24: #{tpu_custom_call.1} parent=11 // pred_fallthru
          _
        // Predicated region
        $region25: #{tpu_custom_call.1} parent=11 // pred_check
          %p174 = pneg %p124
        $region26: #{tpu_custom_call.1} parent=11 // pred_check_branch
          %176 = sbr.rel (%p174) target = $region28
        $region27: #{tpu_custom_call.1} parent=11 // pred_region
          _
        $region28: #{tpu_custom_call.1} parent=11 // pred_fallthru
          _
      $region12: #{tpu_custom_call.1} parent=5 // pred_fallthru
        _
      %p177 = scmp.lt.s32.totalorder %s14, 8
      // Predicated region
      $region29: #{tpu_custom_call.1} parent=5 // pred_check
        %p178 = pneg %p177
      $region30: #{tpu_custom_call.1} parent=5 // pred_check_branch
        %180 = sbr.rel (%p178) target = $region32
      $region31: #{tpu_custom_call.1} parent=5 // pred_region
        // Predicated region
        $region33: #{tpu_custom_call.1} parent=31 // pred_check
          %p181 = pneg %p34
        $region34: #{tpu_custom_call.1} parent=31 // pred_check_branch
          %183 = sbr.rel (%p181) target = $region36
        $region35: #{tpu_custom_call.1} parent=31 // pred_region
          %s184 = smul.u32 2, %s14
          %p185 = scmp.lt.s32.totalorder %s184, 15
          %s186 = scalar_select %p185, %s184, 15
          %s187 = smul.addr %s186, 32
          %s188 = smul.addr %s187, 8
          %s189 = scalar_lea.vmem %s0, %s188
          %s190 = smul.u32 2, %s14
        $region36: #{tpu_custom_call.1} parent=31 // pred_fallthru
          _
      $region32: #{tpu_custom_call.1} parent=5 // pred_fallthru
        _
      %p191 = scmp.le.s32.totalorder 1, %s14
      %p192 = scmp.lt.s32.totalorder %s14, 9
      %p193 = pnand %p191, %p192
      %p194 = pneg %p193
      // Predicated region
      $region37: #{tpu_custom_call.1} parent=5 // pred_check
        _
      $region38: #{tpu_custom_call.1} parent=5 // pred_check_branch
        %196 = sbr.rel (%p193) target = $region40
      $region39: #{tpu_custom_call.1} parent=5 // pred_region
        %s197 = ssub.s32 %s14, 1
        %s198 = smul.u32 2, %s19
        %p199 = scmp.lt.s32.totalorder %s198, 15
        %s200 = scalar_select %p199, %s198, 15
        %s201 = smul.addr %s200, 32
        %s202 = smul.addr %s201, 8
        %s203 = scalar_lea.vmem %s0, %s202
        %p204 = pneg %p40
        %p205 = pneg %p37
        %p206 = pneg %p61
        %p207 = pneg %p58
        %p208 = pneg %p82
        %p209 = pneg %p79
        %p210 = pneg %p103
        %p211 = pneg %p100
        %p212 = pneg %p124
        %p213 = pneg %p121
        %p214 = pneg %p150
        %p215 = pneg %p147
        %s216 = sand.u32 %s137, 1
        %s217 = scalar_lea.sflag [#allocation4], %s216
        %s218 = sand.u32 %s137, 1
        %s219 = smul.addr %s218, 32
        %s220 = scalar_lea.vmem [#allocation3], %s219
        %s221 = smul.u32 2, %s19
        %p222 = scmp.lt.s32.totalorder %s221, 15
        %s223 = scalar_select %p222, %s221, 15
        %s224 = smul.addr %s223, 32
        %s225 = smul.addr %s224, 8
        %s226 = scalar_lea.vmem %s0, %s225
        %s227 = smul.u32 2, %s19
        %s228 = smul.u32 4, %s19
        %vm229 = vcmask 31744
        %230 = vst.msk [vmem:[#allocation2] sm:$0xff] %vm229, 0.0
        %231 = vst.msk [vmem:[#allocation2 + $0x8] sm:$0xff] %vm229, 0.0
        %vm232 = vcmask 25600
        %233 = vst.msk [vmem:[#allocation2 + $0x10] sm:$0x3] %vm232, 0.0
        %234 = vst.msk [vmem:[#allocation2 + $0x18] sm:$0xff] %vm229, 0.0
        %235 = vst.msk [vmem:[#allocation2 + $0x20] sm:$0xff] %vm229, 0.0
        %236 = vst.msk [vmem:[#allocation2 + $0x28] sm:$0x3] %vm232, 0.0
        %237 = vst.msk [vmem:[#allocation2 + $0x30] sm:$0xff] %vm229, 0.0
        %238 = vst.msk [vmem:[#allocation2 + $0x38] sm:$0xff] %vm229, 0.0
        %239 = vst.msk [vmem:[#allocation2 + $0x40] sm:$0x3] %vm232, 0.0
        %240 = vst.msk [vmem:[#allocation2 + $0x48] sm:$0xff] %vm229, 0.0
        %241 = vst.msk [vmem:[#allocation2 + $0x50] sm:$0xff] %vm229, 0.0
        %242 = vst.msk [vmem:[#allocation2 + $0x58] sm:$0x3] %vm232, 0.0
        %243 = vst.msk [vmem:[#allocation2 + $0x60] sm:$0xff] %vm229, 0.0
        %244 = vst.msk [vmem:[#allocation2 + $0x68] sm:$0xff] %vm229, 0.0
        %245 = vst.msk [vmem:[#allocation2 + $0x70] sm:$0x3] %vm232, 0.0
        %246 = vst.msk [vmem:[#allocation2 + $0x78] sm:$0xff] %vm229, 0.0
        %247 = vst.msk [vmem:[#allocation2 + $0x80] sm:$0xff] %vm229, 0.0
        %248 = vst.msk [vmem:[#allocation2 + $0x88] sm:$0x3] %vm232, 0.0
        %249 = vst.msk [vmem:[#allocation2 + $0x90] sm:$0xff] %vm229, 0.0
        %250 = vst.msk [vmem:[#allocation2 + $0x98] sm:$0xff] %vm229, 0.0
        %251 = vst.msk [vmem:[#allocation2 + $0xa0] sm:$0x3] %vm232, 0.0
        %252 = vst.msk [vmem:[#allocation2 + $0xa8] sm:$0xff] %vm229, 0.0
        %253 = vst.msk [vmem:[#allocation2 + $0xb0] sm:$0xff] %vm229, 0.0
        %254 = vst.msk [vmem:[#allocation2 + $0xb8] sm:$0x3] %vm232, 0.0
        %255 = vst.msk [vmem:[#allocation2 + $0xc0] sm:$0xff] %vm229, 0.0
        %256 = vst.msk [vmem:[#allocation2 + $0xc8] sm:$0xff] %vm229, 0.0
        %257 = vst.msk [vmem:[#allocation2 + $0xd0] sm:$0x3] %vm232, 0.0
        %258 = vst.msk [vmem:[#allocation2 + $0xd8] sm:$0xff] %vm229, 0.0
        %259 = vst.msk [vmem:[#allocation2 + $0xe0] sm:$0xff] %vm229, 0.0
        %260 = vst.msk [vmem:[#allocation2 + $0xe8] sm:$0x3] %vm232, 0.0
        %261 = vst.msk [vmem:[#allocation2 + $0xf0] sm:$0xff] %vm229, 0.0
        %262 = vst.msk [vmem:[#allocation2 + $0xf8] sm:$0xff] %vm229, 0.0
        %263 = vst.msk [vmem:[#allocation2 + $0x100] sm:$0x3] %vm232, 0.0
        %264 = vst.msk [vmem:[#allocation2 + $0x108] sm:$0xff] %vm229, 0.0
        %265 = vst.msk [vmem:[#allocation2 + $0x110] sm:$0xff] %vm229, 0.0
        %266 = vst.msk [vmem:[#allocation2 + $0x118] sm:$0x3] %vm232, 0.0
        %267 = vst.msk [vmem:[#allocation2 + $0x120] sm:$0xff] %vm229, 0.0
        %268 = vst.msk [vmem:[#allocation2 + $0x128] sm:$0xff] %vm229, 0.0
        %269 = vst.msk [vmem:[#allocation2 + $0x130] sm:$0x3] %vm232, 0.0
        %270 = vst.msk [vmem:[#allocation2 + $0x138] sm:$0xff] %vm229, 0.0
        %271 = vst.msk [vmem:[#allocation2 + $0x140] sm:$0xff] %vm229, 0.0
        %272 = vst.msk [vmem:[#allocation2 + $0x148] sm:$0x3] %vm232, 0.0
        %273 = vst.msk [vmem:[#allocation2 + $0x150] sm:$0xff] %vm229, 0.0
        %274 = vst.msk [vmem:[#allocation2 + $0x158] sm:$0xff] %vm229, 0.0
        %275 = vst.msk [vmem:[#allocation2 + $0x160] sm:$0x3] %vm232, 0.0
        %276 = vst.msk [vmem:[#allocation2 + $0x168] sm:$0xff] %vm229, 0.0
        %277 = vst.msk [vmem:[#allocation2 + $0x170] sm:$0xff] %vm229, 0.0
        %278 = vst.msk [vmem:[#allocation2 + $0x178] sm:$0x3] %vm232, 0.0
        %279 = vst.msk [vmem:[#allocation2 + $0x180] sm:$0xff] %vm229, 0.0
        %280 = vst.msk [vmem:[#allocation2 + $0x188] sm:$0xff] %vm229, 0.0
        %281 = vst.msk [vmem:[#allocation2 + $0x190] sm:$0x3] %vm232, 0.0
        %282 = vst.msk [vmem:[#allocation2 + $0x198] sm:$0xff] %vm229, 0.0
        %283 = vst.msk [vmem:[#allocation2 + $0x1a0] sm:$0xff] %vm229, 0.0
        %284 = vst.msk [vmem:[#allocation2 + $0x1a8] sm:$0x3] %vm232, 0.0
        %285 = vst.msk [vmem:[#allocation2 + $0x1b0] sm:$0xff] %vm229, 0.0
        %286 = vst.msk [vmem:[#allocation2 + $0x1b8] sm:$0xff] %vm229, 0.0
        %287 = vst.msk [vmem:[#allocation2 + $0x1c0] sm:$0x3] %vm232, 0.0
        %288 = vst.msk [vmem:[#allocation2 + $0x1c8] sm:$0xff] %vm229, 0.0
        %289 = vst.msk [vmem:[#allocation2 + $0x1d0] sm:$0xff] %vm229, 0.0
        %290 = vst.msk [vmem:[#allocation2 + $0x1d8] sm:$0x3] %vm232, 0.0
        %291 = vst.msk [vmem:[#allocation2 + $0x1e0] sm:$0xff] %vm229, 0.0
        %292 = vst.msk [vmem:[#allocation2 + $0x1e8] sm:$0xff] %vm229, 0.0
        %293 = vst.msk [vmem:[#allocation2 + $0x1f0] sm:$0x3] %vm232, 0.0
        %294 = vst.msk [vmem:[#allocation2 + $0x1f8] sm:$0xff] %vm229, 0.0
        %295 = vst.msk [vmem:[#allocation2 + $0x200] sm:$0xff] %vm229, 0.0
        %296 = vst.msk [vmem:[#allocation2 + $0x208] sm:$0x3] %vm232, 0.0
        %297 = vst.msk [vmem:[#allocation2 + $0x210] sm:$0xff] %vm229, 0.0
        %298 = vst.msk [vmem:[#allocation2 + $0x218] sm:$0xff] %vm229, 0.0
        %299 = vst.msk [vmem:[#allocation2 + $0x220] sm:$0x3] %vm232, 0.0
        %300 = vst.msk [vmem:[#allocation2 + $0x228] sm:$0xff] %vm229, 0.0
        %301 = vst.msk [vmem:[#allocation2 + $0x230] sm:$0xff] %vm229, 0.0
        %302 = vst.msk [vmem:[#allocation2 + $0x238] sm:$0x3] %vm232, 0.0
        %303 = vst.msk [vmem:[#allocation2 + $0x240] sm:$0xff] %vm229, 0.0
        %304 = vst.msk [vmem:[#allocation2 + $0x248] sm:$0xff] %vm229, 0.0
        %305 = vst.msk [vmem:[#allocation2 + $0x250] sm:$0x3] %vm232, 0.0
        %306 = vst.msk [vmem:[#allocation2 + $0x258] sm:$0xff] %vm229, 0.0
        %307 = vst.msk [vmem:[#allocation2 + $0x260] sm:$0xff] %vm229, 0.0
        %308 = vst.msk [vmem:[#allocation2 + $0x268] sm:$0x3] %vm232, 0.0
        %309 = vst.msk [vmem:[#allocation2 + $0x270] sm:$0xff] %vm229, 0.0
        %310 = vst.msk [vmem:[#allocation2 + $0x278] sm:$0xff] %vm229, 0.0
        %311 = vst.msk [vmem:[#allocation2 + $0x280] sm:$0x3] %vm232, 0.0
        %312 = vst.msk [vmem:[#allocation2 + $0x288] sm:$0xff] %vm229, 0.0
        %313 = vst.msk [vmem:[#allocation2 + $0x290] sm:$0xff] %vm229, 0.0
        %314 = vst.msk [vmem:[#allocation2 + $0x298] sm:$0x3] %vm232, 0.0
        %315 = vst.msk [vmem:[#allocation2 + $0x2a0] sm:$0xff] %vm229, 0.0
        %316 = vst.msk [vmem:[#allocation2 + $0x2a8] sm:$0xff] %vm229, 0.0
        %317 = vst.msk [vmem:[#allocation2 + $0x2b0] sm:$0x3] %vm232, 0.0
        %318 = vst.msk [vmem:[#allocation2 + $0x2b8] sm:$0xff] %vm229, 0.0
        %319 = vst.msk [vmem:[#allocation2 + $0x2c0] sm:$0xff] %vm229, 0.0
        %320 = vst.msk [vmem:[#allocation2 + $0x2c8] sm:$0x3] %vm232, 0.0
        %321 = vst.msk [vmem:[#allocation2 + $0x2d0] sm:$0xff] %vm229, 0.0
        %322 = vst.msk [vmem:[#allocation2 + $0x2d8] sm:$0xff] %vm229, 0.0
        %323 = vst.msk [vmem:[#allocation2 + $0x2e0] sm:$0x3] %vm232, 0.0
        %324 = vst.msk [vmem:[#allocation2 + $0x2e8] sm:$0xff] %vm229, 0.0
        %325 = vst.msk [vmem:[#allocation2 + $0x2f0] sm:$0xff] %vm229, 0.0
        %326 = vst.msk [vmem:[#allocation2 + $0x2f8] sm:$0x3] %vm232, 0.0
        %327 = vst.msk [vmem:[#allocation2 + $0x300] sm:$0xff] %vm229, 0.0
        %328 = vst.msk [vmem:[#allocation2 + $0x308] sm:$0xff] %vm229, 0.0
        %329 = vst.msk [vmem:[#allocation2 + $0x310] sm:$0x3] %vm232, 0.0
        %330 = vst.msk [vmem:[#allocation2 + $0x318] sm:$0xff] %vm229, 0.0
        %331 = vst.msk [vmem:[#allocation2 + $0x320] sm:$0xff] %vm229, 0.0
        %332 = vst.msk [vmem:[#allocation2 + $0x328] sm:$0x3] %vm232, 0.0
        %333 = vst.msk [vmem:[#allocation2 + $0x330] sm:$0xff] %vm229, 0.0
        %334 = vst.msk [vmem:[#allocation2 + $0x338] sm:$0xff] %vm229, 0.0
        %335 = vst.msk [vmem:[#allocation2 + $0x340] sm:$0x3] %vm232, 0.0
        %336 = vst.msk [vmem:[#allocation2 + $0x348] sm:$0xff] %vm229, 0.0
        %337 = vst.msk [vmem:[#allocation2 + $0x350] sm:$0xff] %vm229, 0.0
        %338 = vst.msk [vmem:[#allocation2 + $0x358] sm:$0x3] %vm232, 0.0
        %v339 = vld [vmem:[%s226] sm:$0xff]
        %v340 = vld [vmem:[%s226 + $0x8] sm:$0xff]
        %v341 = vld [vmem:[%s226 + $0x10] sm:$0xff]
        %v342 = vld [vmem:[%s226 + $0x18] sm:$0xff]
        %v343 = vld [vmem:[%s226 + $0x20] sm:$0xff]
        %v344 = vld [vmem:[%s226 + $0x28] sm:$0xff]
        %v345 = vld [vmem:[%s226 + $0x30] sm:$0xff]
        %v346 = vld [vmem:[%s226 + $0x38] sm:$0xff]
        %v347 = vld [vmem:[%s226 + $0x40] sm:$0xff]
        %v348 = vld [vmem:[%s226 + $0x48] sm:$0xff]
        %v349 = vld [vmem:[%s226 + $0x50] sm:$0xff]
        %v350 = vld [vmem:[%s226 + $0x58] sm:$0xff]
        %v351 = vld [vmem:[%s226 + $0x60] sm:$0xff]
        %v352 = vld [vmem:[%s226 + $0x68] sm:$0xff]
        %v353 = vld [vmem:[%s226 + $0x70] sm:$0xff]
        %v354 = vld [vmem:[%s226 + $0x78] sm:$0xff]
        %v355 = vld [vmem:[%s226 + $0x80] sm:$0xff]
        %v356 = vld [vmem:[%s226 + $0x88] sm:$0xff]
        %v357 = vld [vmem:[%s226 + $0x90] sm:$0xff]
        %v358 = vld [vmem:[%s226 + $0x98] sm:$0xff]
        %v359 = vld [vmem:[%s226 + $0xa0] sm:$0xff]
        %v360 = vld [vmem:[%s226 + $0xa8] sm:$0xff]
        %v361 = vld [vmem:[%s226 + $0xb0] sm:$0xff]
        %v362 = vld [vmem:[%s226 + $0xb8] sm:$0xff]
        %v363 = vld [vmem:[%s226 + $0xc0] sm:$0xff]
        %v364 = vld [vmem:[%s226 + $0xc8] sm:$0xff]
        %v365 = vld [vmem:[%s226 + $0xd0] sm:$0xff]
        %v366 = vld [vmem:[%s226 + $0xd8] sm:$0xff]
        %v367 = vld [vmem:[%s226 + $0xe0] sm:$0xff]
        %v368 = vld [vmem:[%s226 + $0xe8] sm:$0xff]
        %v369 = vld [vmem:[%s226 + $0xf0] sm:$0xff]
        %v370 = vld [vmem:[%s226 + $0xf8] sm:$0xff]
        %v371 = vld [vmem:[%s226 + $0x100] sm:$0xff]
        %v372 = vld [vmem:[%s226 + $0x108] sm:$0xff]
        %v373 = vld [vmem:[%s226 + $0x110] sm:$0xff]
        %v374 = vld [vmem:[%s226 + $0x118] sm:$0xff]
        %v375 = vld [vmem:[%s226 + $0x120] sm:$0xff]
        %v376 = vld [vmem:[%s226 + $0x128] sm:$0xff]
        %v377 = vld [vmem:[%s226 + $0x130] sm:$0xff]
        %v378 = vld [vmem:[%s226 + $0x138] sm:$0xff]
        %v379 = vld [vmem:[%s226 + $0x140] sm:$0xff]
        %v380 = vld [vmem:[%s226 + $0x148] sm:$0xff]
        %v381 = vld [vmem:[%s226 + $0x150] sm:$0xff]
        %v382 = vld [vmem:[%s226 + $0x158] sm:$0xff]
        %v383 = vld [vmem:[%s226 + $0x160] sm:$0xff]
        %v384 = vld [vmem:[%s226 + $0x168] sm:$0xff]
        %v385 = vld [vmem:[%s226 + $0x170] sm:$0xff]
        %v386 = vld [vmem:[%s226 + $0x178] sm:$0xff]
        %v387 = vld [vmem:[%s226 + $0x180] sm:$0xff]
        %v388 = vld [vmem:[%s226 + $0x188] sm:$0xff]
        %v389 = vld [vmem:[%s226 + $0x190] sm:$0xff]
        %v390 = vld [vmem:[%s226 + $0x198] sm:$0xff]
        %v391 = vld [vmem:[%s226 + $0x1a0] sm:$0xff]
        %v392 = vld [vmem:[%s226 + $0x1a8] sm:$0xff]
        %v393 = vld [vmem:[%s226 + $0x1b0] sm:$0xff]
        %v394 = vld [vmem:[%s226 + $0x1b8] sm:$0xff]
        %v395 = vld [vmem:[%s226 + $0x1c0] sm:$0xff]
        %v396 = vld [vmem:[%s226 + $0x1c8] sm:$0xff]
        %v397 = vld [vmem:[%s226 + $0x1d0] sm:$0xff]
        %v398 = vld [vmem:[%s226 + $0x1d8] sm:$0xff]
        %v399 = vld [vmem:[%s226 + $0x1e0] sm:$0xff]
        %v400 = vld [vmem:[%s226 + $0x1e8] sm:$0xff]
        %v401 = vld [vmem:[%s226 + $0x1f0] sm:$0xff]
        %v402 = vld [vmem:[%s226 + $0x1f8] sm:$0xff]
        %s403 = scalar_lea.vmem [#allocation2], 24
        %404 = vst.msk [vmem:[%s403 + $0x1] sm:$0xff] %vm229, %v339
        %405 = vst.msk [vmem:[%s403 + $0x9] sm:$0xff] %vm229, %v340
        %406 = vst.msk [vmem:[%s403 + $0x19] sm:$0xff] %vm229, %v341
        %407 = vst.msk [vmem:[%s403 + $0x21] sm:$0xff] %vm229, %v342
        %408 = vst.msk [vmem:[%s403 + $0x31] sm:$0xff] %vm229, %v343
        %409 = vst.msk [vmem:[%s403 + $0x39] sm:$0xff] %vm229, %v344
        %410 = vst.msk [vmem:[%s403 + $0x49] sm:$0xff] %vm229, %v345
        %411 = vst.msk [vmem:[%s403 + $0x51] sm:$0xff] %vm229, %v346
        %412 = vst.msk [vmem:[%s403 + $0x61] sm:$0xff] %vm229, %v347
        %413 = vst.msk [vmem:[%s403 + $0x69] sm:$0xff] %vm229, %v348
        %414 = vst.msk [vmem:[%s403 + $0x79] sm:$0xff] %vm229, %v349
        %415 = vst.msk [vmem:[%s403 + $0x81] sm:$0xff] %vm229, %v350
        %416 = vst.msk [vmem:[%s403 + $0x91] sm:$0xff] %vm229, %v351
        %417 = vst.msk [vmem:[%s403 + $0x99] sm:$0xff] %vm229, %v352
        %418 = vst.msk [vmem:[%s403 + $0xa9] sm:$0xff] %vm229, %v353
        %419 = vst.msk [vmem:[%s403 + $0xb1] sm:$0xff] %vm229, %v354
        %420 = vst.msk [vmem:[%s403 + $0xc1] sm:$0xff] %vm229, %v355
        %421 = vst.msk [vmem:[%s403 + $0xc9] sm:$0xff] %vm229, %v356
        %422 = vst.msk [vmem:[%s403 + $0xd9] sm:$0xff] %vm229, %v357
        %423 = vst.msk [vmem:[%s403 + $0xe1] sm:$0xff] %vm229, %v358
        %424 = vst.msk [vmem:[%s403 + $0xf1] sm:$0xff] %vm229, %v359
        %425 = vst.msk [vmem:[%s403 + $0xf9] sm:$0xff] %vm229, %v360
        %426 = vst.msk [vmem:[%s403 + $0x109] sm:$0xff] %vm229, %v361
        %427 = vst.msk [vmem:[%s403 + $0x111] sm:$0xff] %vm229, %v362
        %428 = vst.msk [vmem:[%s403 + $0x121] sm:$0xff] %vm229, %v363
        %429 = vst.msk [vmem:[%s403 + $0x129] sm:$0xff] %vm229, %v364
        %430 = vst.msk [vmem:[%s403 + $0x139] sm:$0xff] %vm229, %v365
        %431 = vst.msk [vmem:[%s403 + $0x141] sm:$0xff] %vm229, %v366
        %432 = vst.msk [vmem:[%s403 + $0x151] sm:$0xff] %vm229, %v367
        %433 = vst.msk [vmem:[%s403 + $0x159] sm:$0xff] %vm229, %v368
        %434 = vst.msk [vmem:[%s403 + $0x169] sm:$0xff] %vm229, %v369
        %435 = vst.msk [vmem:[%s403 + $0x171] sm:$0xff] %vm229, %v370
        %436 = vst.msk [vmem:[%s403 + $0x1b1] sm:$0xff] %vm229, %v371
        %437 = vst.msk [vmem:[%s403 + $0x1b9] sm:$0xff] %vm229, %v372
        %438 = vst.msk [vmem:[%s403 + $0x1c9] sm:$0xff] %vm229, %v373
        %439 = vst.msk [vmem:[%s403 + $0x1d1] sm:$0xff] %vm229, %v374
        %440 = vst.msk [vmem:[%s403 + $0x1e1] sm:$0xff] %vm229, %v375
        %441 = vst.msk [vmem:[%s403 + $0x1e9] sm:$0xff] %vm229, %v376
        %442 = vst.msk [vmem:[%s403 + $0x1f9] sm:$0xff] %vm229, %v377
        %443 = vst.msk [vmem:[%s403 + $0x201] sm:$0xff] %vm229, %v378
        %444 = vst.msk [vmem:[%s403 + $0x211] sm:$0xff] %vm229, %v379
        %445 = vst.msk [vmem:[%s403 + $0x219] sm:$0xff] %vm229, %v380
        %446 = vst.msk [vmem:[%s403 + $0x229] sm:$0xff] %vm229, %v381
        %447 = vst.msk [vmem:[%s403 + $0x231] sm:$0xff] %vm229, %v382
        %448 = vst.msk [vmem:[%s403 + $0x241] sm:$0xff] %vm229, %v383
        %449 = vst.msk [vmem:[%s403 + $0x249] sm:$0xff] %vm229, %v384
        %450 = vst.msk [vmem:[%s403 + $0x259] sm:$0xff] %vm229, %v385
        %451 = vst.msk [vmem:[%s403 + $0x261] sm:$0xff] %vm229, %v386
        %452 = vst.msk [vmem:[%s403 + $0x271] sm:$0xff] %vm229, %v387
        %453 = vst.msk [vmem:[%s403 + $0x279] sm:$0xff] %vm229, %v388
        %454 = vst.msk [vmem:[%s403 + $0x289] sm:$0xff] %vm229, %v389
        %455 = vst.msk [vmem:[%s403 + $0x291] sm:$0xff] %vm229, %v390
        %456 = vst.msk [vmem:[%s403 + $0x2a1] sm:$0xff] %vm229, %v391
        %457 = vst.msk [vmem:[%s403 + $0x2a9] sm:$0xff] %vm229, %v392
        %458 = vst.msk [vmem:[%s403 + $0x2b9] sm:$0xff] %vm229, %v393
        %459 = vst.msk [vmem:[%s403 + $0x2c1] sm:$0xff] %vm229, %v394
        %460 = vst.msk [vmem:[%s403 + $0x2d1] sm:$0xff] %vm229, %v395
        %461 = vst.msk [vmem:[%s403 + $0x2d9] sm:$0xff] %vm229, %v396
        %462 = vst.msk [vmem:[%s403 + $0x2e9] sm:$0xff] %vm229, %v397
        %463 = vst.msk [vmem:[%s403 + $0x2f1] sm:$0xff] %vm229, %v398
        %464 = vst.msk [vmem:[%s403 + $0x301] sm:$0xff] %vm229, %v399
        %465 = vst.msk [vmem:[%s403 + $0x309] sm:$0xff] %vm229, %v400
        %466 = vst.msk [vmem:[%s403 + $0x319] sm:$0xff] %vm229, %v401
        %467 = vst.msk [vmem:[%s403 + $0x321] sm:$0xff] %vm229, %v402
        %v468 = vld [vmem:[%s1] sm:$0x7]
        %v469 = vld [vmem:[%s1 + $0x4] sm:$0x7]
        %v470 = vld [vmem:[%s1 + $0x8] sm:$0x7]
        %v471 = vld [vmem:[%s2] sm:$0x1]
        %v472 = vld [vmem:[#allocation2] sm:$0xff]
        %v473 = vld [vmem:[#allocation2 + $0x8] sm:$0xff]
        %v474 = vld [vmem:[#allocation2 + $0x18] sm:$0xff]
        %v475 = vld [vmem:[#allocation2 + $0x20] sm:$0xff]
        %v476 = vld [vmem:[#allocation2 + $0x30] sm:$0xff]
        %v477 = vld [vmem:[#allocation2 + $0x38] sm:$0xff]
        %v478 = vld [vmem:[#allocation2 + $0x48] sm:$0xff]
        %v479 = vld [vmem:[#allocation2 + $0x50] sm:$0xff]
        %v480 = vld [vmem:[#allocation2 + $0x60] sm:$0xff]
        %v481 = vld [vmem:[#allocation2 + $0x68] sm:$0xff]
        %v482 = vld [vmem:[#allocation2 + $0x78] sm:$0xff]
        %v483 = vld [vmem:[#allocation2 + $0x80] sm:$0xff]
        %v484 = vld [vmem:[#allocation2 + $0x90] sm:$0xff]
        %v485 = vld [vmem:[#allocation2 + $0x98] sm:$0xff]
        %v486 = vld [vmem:[#allocation2 + $0xa8] sm:$0xff]
        %v487 = vld [vmem:[#allocation2 + $0xb0] sm:$0xff]
        %v488 = vld [vmem:[#allocation2 + $0xc0] sm:$0xff]
        %v489 = vld [vmem:[#allocation2 + $0xc8] sm:$0xff]
        %v490 = vld [vmem:[#allocation2 + $0xd8] sm:$0xff]
        %v491 = vld [vmem:[#allocation2 + $0xe0] sm:$0xff]
        %v492 = vld [vmem:[#allocation2 + $0xf0] sm:$0xff]
        %v493 = vld [vmem:[#allocation2 + $0xf8] sm:$0xff]
        %v494 = vld [vmem:[#allocation2 + $0x108] sm:$0xff]
        %v495 = vld [vmem:[#allocation2 + $0x110] sm:$0xff]
        %v496 = vld [vmem:[#allocation2 + $0x120] sm:$0xff]
        %v497 = vld [vmem:[#allocation2 + $0x128] sm:$0xff]
        %v498 = vld [vmem:[#allocation2 + $0x138] sm:$0xff]
        %v499 = vld [vmem:[#allocation2 + $0x140] sm:$0xff]
        %v500 = vld [vmem:[#allocation2 + $0x150] sm:$0xff]
        %v501 = vld [vmem:[#allocation2 + $0x158] sm:$0xff]
        %v502 = vld [vmem:[#allocation2 + $0x168] sm:$0xff]
        %v503 = vld [vmem:[#allocation2 + $0x170] sm:$0xff]
        %v504 = vld [vmem:[#allocation2 + $0x180] sm:$0xff]
        %v505 = vld [vmem:[#allocation2 + $0x188] sm:$0xff]
        %v506 = vld [vmem:[#allocation2 + $0x198] sm:$0xff]
        %v507 = vld [vmem:[#allocation2 + $0x1a0] sm:$0xff]
        %v508 = vld [vmem:[#allocation2 + $0x1b0] sm:$0xff]
        %v509 = vld [vmem:[#allocation2 + $0x1b8] sm:$0xff]
        %v510 = vld [vmem:[#allocation2 + $0x1c8] sm:$0xff]
        %v511 = vld [vmem:[#allocation2 + $0x1d0] sm:$0xff]
        %v512 = vld [vmem:[#allocation2 + $0x1e0] sm:$0xff]
        %v513 = vld [vmem:[#allocation2 + $0x1e8] sm:$0xff]
        %v514 = vld [vmem:[#allocation2 + $0x1f8] sm:$0xff]
        %v515 = vld [vmem:[#allocation2 + $0x200] sm:$0xff]
        %v516 = vld [vmem:[#allocation2 + $0x210] sm:$0xff]
        %v517 = vld [vmem:[#allocation2 + $0x218] sm:$0xff]
        %v518 = vld [vmem:[#allocation2 + $0x228] sm:$0xff]
        %v519 = vld [vmem:[#allocation2 + $0x230] sm:$0xff]
        %v520 = vld [vmem:[#allocation2 + $0x240] sm:$0xff]
        %v521 = vld [vmem:[#allocation2 + $0x248] sm:$0xff]
        %v522 = vld [vmem:[#allocation2 + $0x258] sm:$0xff]
        %v523 = vld [vmem:[#allocation2 + $0x260] sm:$0xff]
        %v524 = vld [vmem:[#allocation2 + $0x270] sm:$0xff]
        %v525 = vld [vmem:[#allocation2 + $0x278] sm:$0xff]
        %v526 = vld [vmem:[#allocation2 + $0x288] sm:$0xff]
        %v527 = vld [vmem:[#allocation2 + $0x290] sm:$0xff]
        %v528 = vld [vmem:[#allocation2 + $0x2a0] sm:$0xff]
        %v529 = vld [vmem:[#allocation2 + $0x2a8] sm:$0xff]
        %v530 = vld [vmem:[#allocation2 + $0x2b8] sm:$0xff]
        %v531 = vld [vmem:[#allocation2 + $0x2c0] sm:$0xff]
        %v532 = vld [vmem:[#allocation2 + $0x2d0] sm:$0xff]
        %v533 = vld [vmem:[#allocation2 + $0x2d8] sm:$0xff]
        %v534 = vld [vmem:[#allocation2 + $0x2e8] sm:$0xff]
        %v535 = vld [vmem:[#allocation2 + $0x2f0] sm:$0xff]
        %v536 = vld [vmem:[#allocation2 + $0x300] sm:$0xff]
        %v537 = vld [vmem:[#allocation2 + $0x308] sm:$0xff]
        %v538 = vld [vmem:[#allocation2 + $0x318] sm:$0xff]
        %v539 = vld [vmem:[#allocation2 + $0x320] sm:$0xff]
        %v540 = vld [vmem:[#allocation2 + $0x330] sm:$0xff]
        %v541 = vld [vmem:[#allocation2 + $0x338] sm:$0xff]
        %v542 = vld [vmem:[#allocation2 + $0x348] sm:$0xff]
        %v543 = vld [vmem:[#allocation2 + $0x350] sm:$0xff]
        %v544 = vld [vmem:[#allocation2 + $0x1] sm:$0xff]
        %v545 = vld [vmem:[#allocation2 + $0x9] sm:$0xff]
        %v546 = vld [vmem:[#allocation2 + $0x19] sm:$0xff]
        %v547 = vld [vmem:[#allocation2 + $0x21] sm:$0xff]
        %v548 = vld [vmem:[#allocation2 + $0x31] sm:$0xff]
        %v549 = vld [vmem:[#allocation2 + $0x39] sm:$0xff]
        %v550 = vld [vmem:[#allocation2 + $0x49] sm:$0xff]
        %v551 = vld [vmem:[#allocation2 + $0x51] sm:$0xff]
        %v552 = vld [vmem:[#allocation2 + $0x61] sm:$0xff]
        %v553 = vld [vmem:[#allocation2 + $0x69] sm:$0xff]
        %v554 = vld [vmem:[#allocation2 + $0x79] sm:$0xff]
        %v555 = vld [vmem:[#allocation2 + $0x81] sm:$0xff]
        %v556 = vld [vmem:[#allocation2 + $0x91] sm:$0xff]
        %v557 = vld [vmem:[#allocation2 + $0x99] sm:$0xff]
        %v558 = vld [vmem:[#allocation2 + $0xa9] sm:$0xff]
        %v559 = vld [vmem:[#allocation2 + $0xb1] sm:$0xff]
        %v560 = vld [vmem:[#allocation2 + $0xc1] sm:$0xff]
        %v561 = vld [vmem:[#allocation2 + $0xc9] sm:$0xff]
        %v562 = vld [vmem:[#allocation2 + $0xd9] sm:$0xff]
        %v563 = vld [vmem:[#allocation2 + $0xe1] sm:$0xff]
        %v564 = vld [vmem:[#allocation2 + $0xf1] sm:$0xff]
        %v565 = vld [vmem:[#allocation2 + $0xf9] sm:$0xff]
        %v566 = vld [vmem:[#allocation2 + $0x109] sm:$0xff]
        %v567 = vld [vmem:[#allocation2 + $0x111] sm:$0xff]
        %v568 = vld [vmem:[#allocation2 + $0x121] sm:$0xff]
        %v569 = vld [vmem:[#allocation2 + $0x129] sm:$0xff]
        %v570 = vld [vmem:[#allocation2 + $0x139] sm:$0xff]
        %v571 = vld [vmem:[#allocation2 + $0x141] sm:$0xff]
        %v572 = vld [vmem:[#allocation2 + $0x151] sm:$0xff]
        %v573 = vld [vmem:[#allocation2 + $0x159] sm:$0xff]
        %v574 = vld [vmem:[#allocation2 + $0x169] sm:$0xff]
        %v575 = vld [vmem:[#allocation2 + $0x171] sm:$0xff]
        %v576 = vld [vmem:[#allocation2 + $0x181] sm:$0xff]
        %v577 = vld [vmem:[#allocation2 + $0x189] sm:$0xff]
        %v578 = vld [vmem:[#allocation2 + $0x199] sm:$0xff]
        %v579 = vld [vmem:[#allocation2 + $0x1a1] sm:$0xff]
        %v580 = vld [vmem:[#allocation2 + $0x1b1] sm:$0xff]
        %v581 = vld [vmem:[#allocation2 + $0x1b9] sm:$0xff]
        %v582 = vld [vmem:[#allocation2 + $0x1c9] sm:$0xff]
        %v583 = vld [vmem:[#allocation2 + $0x1d1] sm:$0xff]
        %v584 = vld [vmem:[#allocation2 + $0x1e1] sm:$0xff]
        %v585 = vld [vmem:[#allocation2 + $0x1e9] sm:$0xff]
        %v586 = vld [vmem:[#allocation2 + $0x1f9] sm:$0xff]
        %v587 = vld [vmem:[#allocation2 + $0x201] sm:$0xff]
        %v588 = vld [vmem:[#allocation2 + $0x211] sm:$0xff]
        %v589 = vld [vmem:[#allocation2 + $0x219] sm:$0xff]
        %v590 = vld [vmem:[#allocation2 + $0x229] sm:$0xff]
        %v591 = vld [vmem:[#allocation2 + $0x231] sm:$0xff]
        %v592 = vld [vmem:[#allocation2 + $0x241] sm:$0xff]
        %v593 = vld [vmem:[#allocation2 + $0x249] sm:$0xff]
        %v594 = vld [vmem:[#allocation2 + $0x259] sm:$0xff]
        %v595 = vld [vmem:[#allocation2 + $0x261] sm:$0xff]
        %v596 = vld [vmem:[#allocation2 + $0x271] sm:$0xff]
        %v597 = vld [vmem:[#allocation2 + $0x279] sm:$0xff]
        %v598 = vld [vmem:[#allocation2 + $0x289] sm:$0xff]
        %v599 = vld [vmem:[#allocation2 + $0x291] sm:$0xff]
        %v600 = vld [vmem:[#allocation2 + $0x2a1] sm:$0xff]
        %v601 = vld [vmem:[#allocation2 + $0x2a9] sm:$0xff]
        %v602 = vld [vmem:[#allocation2 + $0x2b9] sm:$0xff]
        %v603 = vld [vmem:[#allocation2 + $0x2c1] sm:$0xff]
        %v604 = vld [vmem:[#allocation2 + $0x2d1] sm:$0xff]
        %v605 = vld [vmem:[#allocation2 + $0x2d9] sm:$0xff]
        %v606 = vld [vmem:[#allocation2 + $0x2e9] sm:$0xff]
        %v607 = vld [vmem:[#allocation2 + $0x2f1] sm:$0xff]
        %v608 = vld [vmem:[#allocation2 + $0x301] sm:$0xff]
        %v609 = vld [vmem:[#allocation2 + $0x309] sm:$0xff]
        %v610 = vld [vmem:[#allocation2 + $0x319] sm:$0xff]
        %v611 = vld [vmem:[#allocation2 + $0x321] sm:$0xff]
        %v612 = vld [vmem:[#allocation2 + $0x331] sm:$0xff]
        %v613 = vld [vmem:[#allocation2 + $0x339] sm:$0xff]
        %v614 = vld [vmem:[#allocation2 + $0x349] sm:$0xff]
        %v615 = vld [vmem:[#allocation2 + $0x351] sm:$0xff]
        %v616 = vld [vmem:[#allocation2 + $0x2] sm:$0xff]
        %v617 = vld [vmem:[#allocation2 + $0xa] sm:$0xff]
        %v618 = vld [vmem:[#allocation2 + $0x1a] sm:$0xff]
        %v619 = vld [vmem:[#allocation2 + $0x22] sm:$0xff]
        %v620 = vld [vmem:[#allocation2 + $0x32] sm:$0xff]
        %v621 = vld [vmem:[#allocation2 + $0x3a] sm:$0xff]
        %v622 = vld [vmem:[#allocation2 + $0x4a] sm:$0xff]
        %v623 = vld [vmem:[#allocation2 + $0x52] sm:$0xff]
        %v624 = vld [vmem:[#allocation2 + $0x62] sm:$0xff]
        %v625 = vld [vmem:[#allocation2 + $0x6a] sm:$0xff]
        %v626 = vld [vmem:[#allocation2 + $0x7a] sm:$0xff]
        %v627 = vld [vmem:[#allocation2 + $0x82] sm:$0xff]
        %v628 = vld [vmem:[#allocation2 + $0x92] sm:$0xff]
        %v629 = vld [vmem:[#allocation2 + $0x9a] sm:$0xff]
        %v630 = vld [vmem:[#allocation2 + $0xaa] sm:$0xff]
        %v631 = vld [vmem:[#allocation2 + $0xb2] sm:$0xff]
        %v632 = vld [vmem:[#allocation2 + $0xc2] sm:$0xff]
        %v633 = vld [vmem:[#allocation2 + $0xca] sm:$0xff]
        %v634 = vld [vmem:[#allocation2 + $0xda] sm:$0xff]
        %v635 = vld [vmem:[#allocation2 + $0xe2] sm:$0xff]
        %v636 = vld [vmem:[#allocation2 + $0xf2] sm:$0xff]
        %v637 = vld [vmem:[#allocation2 + $0xfa] sm:$0xff]
        %v638 = vld [vmem:[#allocation2 + $0x10a] sm:$0xff]
        %v639 = vld [vmem:[#allocation2 + $0x112] sm:$0xff]
        %v640 = vld [vmem:[#allocation2 + $0x122] sm:$0xff]
        %v641 = vld [vmem:[#allocation2 + $0x12a] sm:$0xff]
        %v642 = vld [vmem:[#allocation2 + $0x13a] sm:$0xff]
        %v643 = vld [vmem:[#allocation2 + $0x142] sm:$0xff]
        %v644 = vld [vmem:[#allocation2 + $0x152] sm:$0xff]
        %v645 = vld [vmem:[#allocation2 + $0x15a] sm:$0xff]
        %v646 = vld [vmem:[#allocation2 + $0x16a] sm:$0xff]
        %v647 = vld [vmem:[#allocation2 + $0x172] sm:$0xff]
        %v648 = vld [vmem:[#allocation2 + $0x182] sm:$0xff]
        %v649 = vld [vmem:[#allocation2 + $0x18a] sm:$0xff]
        %v650 = vld [vmem:[#allocation2 + $0x19a] sm:$0xff]
        %v651 = vld [vmem:[#allocation2 + $0x1a2] sm:$0xff]
        %v652 = vld [vmem:[#allocation2 + $0x1b2] sm:$0xff]
        %v653 = vld [vmem:[#allocation2 + $0x1ba] sm:$0xff]
        %v654 = vld [vmem:[#allocation2 + $0x1ca] sm:$0xff]
        %v655 = vld [vmem:[#allocation2 + $0x1d2] sm:$0xff]
        %v656 = vld [vmem:[#allocation2 + $0x1e2] sm:$0xff]
        %v657 = vld [vmem:[#allocation2 + $0x1ea] sm:$0xff]
        %v658 = vld [vmem:[#allocation2 + $0x1fa] sm:$0xff]
        %v659 = vld [vmem:[#allocation2 + $0x202] sm:$0xff]
        %v660 = vld [vmem:[#allocation2 + $0x212] sm:$0xff]
        %v661 = vld [vmem:[#allocation2 + $0x21a] sm:$0xff]
        %v662 = vld [vmem:[#allocation2 + $0x22a] sm:$0xff]
        %v663 = vld [vmem:[#allocation2 + $0x232] sm:$0xff]
        %v664 = vld [vmem:[#allocation2 + $0x242] sm:$0xff]
        %v665 = vld [vmem:[#allocation2 + $0x24a] sm:$0xff]
        %v666 = vld [vmem:[#allocation2 + $0x25a] sm:$0xff]
        %v667 = vld [vmem:[#allocation2 + $0x262] sm:$0xff]
        %v668 = vld [vmem:[#allocation2 + $0x272] sm:$0xff]
        %v669 = vld [vmem:[#allocation2 + $0x27a] sm:$0xff]
        %v670 = vld [vmem:[#allocation2 + $0x28a] sm:$0xff]
        %v671 = vld [vmem:[#allocation2 + $0x292] sm:$0xff]
        %v672 = vld [vmem:[#allocation2 + $0x2a2] sm:$0xff]
        %v673 = vld [vmem:[#allocation2 + $0x2aa] sm:$0xff]
        %v674 = vld [vmem:[#allocation2 + $0x2ba] sm:$0xff]
        %v675 = vld [vmem:[#allocation2 + $0x2c2] sm:$0xff]
        %v676 = vld [vmem:[#allocation2 + $0x2d2] sm:$0xff]
        %v677 = vld [vmem:[#allocation2 + $0x2da] sm:$0xff]
        %v678 = vld [vmem:[#allocation2 + $0x2ea] sm:$0xff]
        %v679 = vld [vmem:[#allocation2 + $0x2f2] sm:$0xff]
        %v680 = vld [vmem:[#allocation2 + $0x302] sm:$0xff]
        %v681 = vld [vmem:[#allocation2 + $0x30a] sm:$0xff]
        %v682 = vld [vmem:[#allocation2 + $0x31a] sm:$0xff]
        %v683 = vld [vmem:[#allocation2 + $0x322] sm:$0xff]
        %v684 = vld [vmem:[#allocation2 + $0x332] sm:$0xff]
        %v685 = vld [vmem:[#allocation2 + $0x33a] sm:$0xff]
        %v686 = vld [vmem:[#allocation2 + $0x34a] sm:$0xff]
        %v687 = vld [vmem:[#allocation2 + $0x352] sm:$0xff]
        %v688 = vlaneseq
        %v689 = vshrl.u32 %v688, 7
        %v690 = vsub.s32 0, %v689
        %v691 = vrot.slane %v468, %v690
        %v692 = vmul.f32 %v472, %v691
        %v693 = vmul.f32 %v473, %v691
        %v694 = vmul.f32 %v474, %v691
        %v695 = vmul.f32 %v475, %v691
        %v696 = vmul.f32 %v476, %v691
        %v697 = vmul.f32 %v477, %v691
        %v698 = vmul.f32 %v478, %v691
        %v699 = vmul.f32 %v479, %v691
        %v700 = vmul.f32 %v480, %v691
        %v701 = vmul.f32 %v481, %v691
        %v702 = vmul.f32 %v482, %v691
        %v703 = vmul.f32 %v483, %v691
        %v704 = vmul.f32 %v484, %v691
        %v705 = vmul.f32 %v485, %v691
        %v706 = vmul.f32 %v486, %v691
        %v707 = vmul.f32 %v487, %v691
        %v708 = vmul.f32 %v488, %v691
        %v709 = vmul.f32 %v489, %v691
        %v710 = vmul.f32 %v490, %v691
        %v711 = vmul.f32 %v491, %v691
        %v712 = vmul.f32 %v492, %v691
        %v713 = vmul.f32 %v493, %v691
        %v714 = vmul.f32 %v494, %v691
        %v715 = vmul.f32 %v495, %v691
        %v716 = vmul.f32 %v496, %v691
        %v717 = vmul.f32 %v497, %v691
        %v718 = vmul.f32 %v498, %v691
        %v719 = vmul.f32 %v499, %v691
        %v720 = vmul.f32 %v500, %v691
        %v721 = vmul.f32 %v501, %v691
        %v722 = vmul.f32 %v502, %v691
        %v723 = vmul.f32 %v503, %v691
        %v724 = vmul.f32 %v508, %v691
        %v725 = vmul.f32 %v509, %v691
        %v726 = vmul.f32 %v510, %v691
        %v727 = vmul.f32 %v511, %v691
        %v728 = vmul.f32 %v512, %v691
        %v729 = vmul.f32 %v513, %v691
        %v730 = vmul.f32 %v514, %v691
        %v731 = vmul.f32 %v515, %v691
        %v732 = vmul.f32 %v516, %v691
        %v733 = vmul.f32 %v517, %v691
        %v734 = vmul.f32 %v518, %v691
        %v735 = vmul.f32 %v519, %v691
        %v736 = vmul.f32 %v520, %v691
        %v737 = vmul.f32 %v521, %v691
        %v738 = vmul.f32 %v522, %v691
        %v739 = vmul.f32 %v523, %v691
        %v740 = vmul.f32 %v524, %v691
        %v741 = vmul.f32 %v525, %v691
        %v742 = vmul.f32 %v526, %v691
        %v743 = vmul.f32 %v527, %v691
        %v744 = vmul.f32 %v528, %v691
        %v745 = vmul.f32 %v529, %v691
        %v746 = vmul.f32 %v530, %v691
        %v747 = vmul.f32 %v531, %v691
        %v748 = vmul.f32 %v532, %v691
        %v749 = vmul.f32 %v533, %v691
        %v750 = vmul.f32 %v534, %v691
        %v751 = vmul.f32 %v535, %v691
        %v752 = vmul.f32 %v536, %v691
        %v753 = vmul.f32 %v537, %v691
        %v754 = vmul.f32 %v538, %v691
        %v755 = vmul.f32 %v539, %v691
        %v756 = vlaneseq
        %v757 = vshrl.u32 %v756, 7
        %v758 = vsub.s32 1, %v757
        %v759 = vrot.slane %v468, %v758
        %v760 = vmul.f32 %v544, %v759
        %v761 = vmul.f32 %v545, %v759
        %v762 = vmul.f32 %v546, %v759
        %v763 = vmul.f32 %v547, %v759
        %v764 = vmul.f32 %v548, %v759
        %v765 = vmul.f32 %v549, %v759
        %v766 = vmul.f32 %v550, %v759
        %v767 = vmul.f32 %v551, %v759
        %v768 = vmul.f32 %v552, %v759
        %v769 = vmul.f32 %v553, %v759
        %v770 = vmul.f32 %v554, %v759
        %v771 = vmul.f32 %v555, %v759
        %v772 = vmul.f32 %v556, %v759
        %v773 = vmul.f32 %v557, %v759
        %v774 = vmul.f32 %v558, %v759
        %v775 = vmul.f32 %v559, %v759
        %v776 = vmul.f32 %v560, %v759
        %v777 = vmul.f32 %v561, %v759
        %v778 = vmul.f32 %v562, %v759
        %v779 = vmul.f32 %v563, %v759
        %v780 = vmul.f32 %v564, %v759
        %v781 = vmul.f32 %v565, %v759
        %v782 = vmul.f32 %v566, %v759
        %v783 = vmul.f32 %v567, %v759
        %v784 = vmul.f32 %v568, %v759
        %v785 = vmul.f32 %v569, %v759
        %v786 = vmul.f32 %v570, %v759
        %v787 = vmul.f32 %v571, %v759
        %v788 = vmul.f32 %v572, %v759
        %v789 = vmul.f32 %v573, %v759
        %v790 = vmul.f32 %v574, %v759
        %v791 = vmul.f32 %v575, %v759
        %v792 = vmul.f32 %v580, %v759
        %v793 = vmul.f32 %v581, %v759
        %v794 = vmul.f32 %v582, %v759
        %v795 = vmul.f32 %v583, %v759
        %v796 = vmul.f32 %v584, %v759
        %v797 = vmul.f32 %v585, %v759
        %v798 = vmul.f32 %v586, %v759
        %v799 = vmul.f32 %v587, %v759
        %v800 = vmul.f32 %v588, %v759
        %v801 = vmul.f32 %v589, %v759
        %v802 = vmul.f32 %v590, %v759
        %v803 = vmul.f32 %v591, %v759
        %v804 = vmul.f32 %v592, %v759
        %v805 = vmul.f32 %v593, %v759
        %v806 = vmul.f32 %v594, %v759
        %v807 = vmul.f32 %v595, %v759
        %v808 = vmul.f32 %v596, %v759
        %v809 = vmul.f32 %v597, %v759
        %v810 = vmul.f32 %v598, %v759
        %v811 = vmul.f32 %v599, %v759
        %v812 = vmul.f32 %v600, %v759
        %v813 = vmul.f32 %v601, %v759
        %v814 = vmul.f32 %v602, %v759
        %v815 = vmul.f32 %v603, %v759
        %v816 = vmul.f32 %v604, %v759
        %v817 = vmul.f32 %v605, %v759
        %v818 = vmul.f32 %v606, %v759
        %v819 = vmul.f32 %v607, %v759
        %v820 = vmul.f32 %v608, %v759
        %v821 = vmul.f32 %v609, %v759
        %v822 = vmul.f32 %v610, %v759
        %v823 = vmul.f32 %v611, %v759
        %v824 = vadd.f32 %v692, %v760
        %v825 = vadd.f32 %v693, %v761
        %v826 = vadd.f32 %v694, %v762
        %v827 = vadd.f32 %v695, %v763
        %v828 = vadd.f32 %v696, %v764
        %v829 = vadd.f32 %v697, %v765
        %v830 = vadd.f32 %v698, %v766
        %v831 = vadd.f32 %v699, %v767
        %v832 = vadd.f32 %v700, %v768
        %v833 = vadd.f32 %v701, %v769
        %v834 = vadd.f32 %v702, %v770
        %v835 = vadd.f32 %v703, %v771
        %v836 = vadd.f32 %v704, %v772
        %v837 = vadd.f32 %v705, %v773
        %v838 = vadd.f32 %v706, %v774
        %v839 = vadd.f32 %v707, %v775
        %v840 = vadd.f32 %v708, %v776
        %v841 = vadd.f32 %v709, %v777
        %v842 = vadd.f32 %v710, %v778
        %v843 = vadd.f32 %v711, %v779
        %v844 = vadd.f32 %v712, %v780
        %v845 = vadd.f32 %v713, %v781
        %v846 = vadd.f32 %v714, %v782
        %v847 = vadd.f32 %v715, %v783
        %v848 = vadd.f32 %v716, %v784
        %v849 = vadd.f32 %v717, %v785
        %v850 = vadd.f32 %v718, %v786
        %v851 = vadd.f32 %v719, %v787
        %v852 = vadd.f32 %v720, %v788
        %v853 = vadd.f32 %v721, %v789
        %v854 = vadd.f32 %v722, %v790
        %v855 = vadd.f32 %v723, %v791
        %v856 = vadd.f32 %v724, %v792
        %v857 = vadd.f32 %v725, %v793
        %v858 = vadd.f32 %v726, %v794
        %v859 = vadd.f32 %v727, %v795
        %v860 = vadd.f32 %v728, %v796
        %v861 = vadd.f32 %v729, %v797
        %v862 = vadd.f32 %v730, %v798
        %v863 = vadd.f32 %v731, %v799
        %v864 = vadd.f32 %v732, %v800
        %v865 = vadd.f32 %v733, %v801
        %v866 = vadd.f32 %v734, %v802
        %v867 = vadd.f32 %v735, %v803
        %v868 = vadd.f32 %v736, %v804
        %v869 = vadd.f32 %v737, %v805
        %v870 = vadd.f32 %v738, %v806
        %v871 = vadd.f32 %v739, %v807
        %v872 = vadd.f32 %v740, %v808
        %v873 = vadd.f32 %v741, %v809
        %v874 = vadd.f32 %v742, %v810
        %v875 = vadd.f32 %v743, %v811
        %v876 = vadd.f32 %v744, %v812
        %v877 = vadd.f32 %v745, %v813
        %v878 = vadd.f32 %v746, %v814
        %v879 = vadd.f32 %v747, %v815
        %v880 = vadd.f32 %v748, %v816
        %v881 = vadd.f32 %v749, %v817
        %v882 = vadd.f32 %v750, %v818
        %v883 = vadd.f32 %v751, %v819
        %v884 = vadd.f32 %v752, %v820
        %v885 = vadd.f32 %v753, %v821
        %v886 = vadd.f32 %v754, %v822
        %v887 = vadd.f32 %v755, %v823
        %v888 = vlaneseq
        %v889 = vshrl.u32 %v888, 7
        %v890 = vsub.s32 2, %v889
        %v891 = vrot.slane %v468, %v890
        %v892 = vmul.f32 %v616, %v891
        %v893 = vmul.f32 %v617, %v891
        %v894 = vmul.f32 %v618, %v891
        %v895 = vmul.f32 %v619, %v891
        %v896 = vmul.f32 %v620, %v891
        %v897 = vmul.f32 %v621, %v891
        %v898 = vmul.f32 %v622, %v891
        %v899 = vmul.f32 %v623, %v891
        %v900 = vmul.f32 %v624, %v891
        %v901 = vmul.f32 %v625, %v891
        %v902 = vmul.f32 %v626, %v891
        %v903 = vmul.f32 %v627, %v891
        %v904 = vmul.f32 %v628, %v891
        %v905 = vmul.f32 %v629, %v891
        %v906 = vmul.f32 %v630, %v891
        %v907 = vmul.f32 %v631, %v891
        %v908 = vmul.f32 %v632, %v891
        %v909 = vmul.f32 %v633, %v891
        %v910 = vmul.f32 %v634, %v891
        %v911 = vmul.f32 %v635, %v891
        %v912 = vmul.f32 %v636, %v891
        %v913 = vmul.f32 %v637, %v891
        %v914 = vmul.f32 %v638, %v891
        %v915 = vmul.f32 %v639, %v891
        %v916 = vmul.f32 %v640, %v891
        %v917 = vmul.f32 %v641, %v891
        %v918 = vmul.f32 %v642, %v891
        %v919 = vmul.f32 %v643, %v891
        %v920 = vmul.f32 %v644, %v891
        %v921 = vmul.f32 %v645, %v891
        %v922 = vmul.f32 %v646, %v891
        %v923 = vmul.f32 %v647, %v891
        %v924 = vmul.f32 %v652, %v891
        %v925 = vmul.f32 %v653, %v891
        %v926 = vmul.f32 %v654, %v891
        %v927 = vmul.f32 %v655, %v891
        %v928 = vmul.f32 %v656, %v891
        %v929 = vmul.f32 %v657, %v891
        %v930 = vmul.f32 %v658, %v891
        %v931 = vmul.f32 %v659, %v891
        %v932 = vmul.f32 %v660, %v891
        %v933 = vmul.f32 %v661, %v891
        %v934 = vmul.f32 %v662, %v891
        %v935 = vmul.f32 %v663, %v891
        %v936 = vmul.f32 %v664, %v891
        %v937 = vmul.f32 %v665, %v891
        %v938 = vmul.f32 %v666, %v891
        %v939 = vmul.f32 %v667, %v891
        %v940 = vmul.f32 %v668, %v891
        %v941 = vmul.f32 %v669, %v891
        %v942 = vmul.f32 %v670, %v891
        %v943 = vmul.f32 %v671, %v891
        %v944 = vmul.f32 %v672, %v891
        %v945 = vmul.f32 %v673, %v891
        %v946 = vmul.f32 %v674, %v891
        %v947 = vmul.f32 %v675, %v891
        %v948 = vmul.f32 %v676, %v891
        %v949 = vmul.f32 %v677, %v891
        %v950 = vmul.f32 %v678, %v891
        %v951 = vmul.f32 %v679, %v891
        %v952 = vmul.f32 %v680, %v891
        %v953 = vmul.f32 %v681, %v891
        %v954 = vmul.f32 %v682, %v891
        %v955 = vmul.f32 %v683, %v891
        %v956 = vadd.f32 %v824, %v892
        %v957 = vadd.f32 %v825, %v893
        %v958 = vadd.f32 %v826, %v894
        %v959 = vadd.f32 %v827, %v895
        %v960 = vadd.f32 %v828, %v896
        %v961 = vadd.f32 %v829, %v897
        %v962 = vadd.f32 %v830, %v898
        %v963 = vadd.f32 %v831, %v899
        %v964 = vadd.f32 %v832, %v900
        %v965 = vadd.f32 %v833, %v901
        %v966 = vadd.f32 %v834, %v902
        %v967 = vadd.f32 %v835, %v903
        %v968 = vadd.f32 %v836, %v904
        %v969 = vadd.f32 %v837, %v905
        %v970 = vadd.f32 %v838, %v906
        %v971 = vadd.f32 %v839, %v907
        %v972 = vadd.f32 %v840, %v908
        %v973 = vadd.f32 %v841, %v909
        %v974 = vadd.f32 %v842, %v910
        %v975 = vadd.f32 %v843, %v911
        %v976 = vadd.f32 %v844, %v912
        %v977 = vadd.f32 %v845, %v913
        %v978 = vadd.f32 %v846, %v914
        %v979 = vadd.f32 %v847, %v915
        %v980 = vadd.f32 %v848, %v916
        %v981 = vadd.f32 %v849, %v917
        %v982 = vadd.f32 %v850, %v918
        %v983 = vadd.f32 %v851, %v919
        %v984 = vadd.f32 %v852, %v920
        %v985 = vadd.f32 %v853, %v921
        %v986 = vadd.f32 %v854, %v922
        %v987 = vadd.f32 %v855, %v923
        %v988 = vadd.f32 %v856, %v924
        %v989 = vadd.f32 %v857, %v925
        %v990 = vadd.f32 %v858, %v926
        %v991 = vadd.f32 %v859, %v927
        %v992 = vadd.f32 %v860, %v928
        %v993 = vadd.f32 %v861, %v929
        %v994 = vadd.f32 %v862, %v930
        %v995 = vadd.f32 %v863, %v931
        %v996 = vadd.f32 %v864, %v932
        %v997 = vadd.f32 %v865, %v933
        %v998 = vadd.f32 %v866, %v934
        %v999 = vadd.f32 %v867, %v935
        %v1000 = vadd.f32 %v868, %v936
        %v1001 = vadd.f32 %v869, %v937
        %v1002 = vadd.f32 %v870, %v938
        %v1003 = vadd.f32 %v871, %v939
        %v1004 = vadd.f32 %v872, %v940
        %v1005 = vadd.f32 %v873, %v941
        %v1006 = vadd.f32 %v874, %v942
        %v1007 = vadd.f32 %v875, %v943
        %v1008 = vadd.f32 %v876, %v944
        %v1009 = vadd.f32 %v877, %v945
        %v1010 = vadd.f32 %v878, %v946
        %v1011 = vadd.f32 %v879, %v947
        %v1012 = vadd.f32 %v880, %v948
        %v1013 = vadd.f32 %v881, %v949
        %v1014 = vadd.f32 %v882, %v950
        %v1015 = vadd.f32 %v883, %v951
        %v1016 = vadd.f32 %v884, %v952
        %v1017 = vadd.f32 %v885, %v953
        %v1018 = vadd.f32 %v886, %v954
        %v1019 = vadd.f32 %v887, %v955
        %v1020 = vlaneseq
        %v1021 = vshrl.u32 %v1020, 7
        %v1022 = vsub.s32 0, %v1021
        %v1023 = vrot.slane %v469, %v1022
        %v1024 = vmul.f32 %v474, %v1023
        %v1025 = vmul.f32 %v475, %v1023
        %v1026 = vmul.f32 %v476, %v1023
        %v1027 = vmul.f32 %v477, %v1023
        %v1028 = vmul.f32 %v478, %v1023
        %v1029 = vmul.f32 %v479, %v1023
        %v1030 = vmul.f32 %v480, %v1023
        %v1031 = vmul.f32 %v481, %v1023
        %v1032 = vmul.f32 %v482, %v1023
        %v1033 = vmul.f32 %v483, %v1023
        %v1034 = vmul.f32 %v484, %v1023
        %v1035 = vmul.f32 %v485, %v1023
        %v1036 = vmul.f32 %v486, %v1023
        %v1037 = vmul.f32 %v487, %v1023
        %v1038 = vmul.f32 %v488, %v1023
        %v1039 = vmul.f32 %v489, %v1023
        %v1040 = vmul.f32 %v490, %v1023
        %v1041 = vmul.f32 %v491, %v1023
        %v1042 = vmul.f32 %v492, %v1023
        %v1043 = vmul.f32 %v493, %v1023
        %v1044 = vmul.f32 %v494, %v1023
        %v1045 = vmul.f32 %v495, %v1023
        %v1046 = vmul.f32 %v496, %v1023
        %v1047 = vmul.f32 %v497, %v1023
        %v1048 = vmul.f32 %v498, %v1023
        %v1049 = vmul.f32 %v499, %v1023
        %v1050 = vmul.f32 %v500, %v1023
        %v1051 = vmul.f32 %v501, %v1023
        %v1052 = vmul.f32 %v502, %v1023
        %v1053 = vmul.f32 %v503, %v1023
        %v1054 = vmul.f32 %v504, %v1023
        %v1055 = vmul.f32 %v505, %v1023
        %v1056 = vmul.f32 %v510, %v1023
        %v1057 = vmul.f32 %v511, %v1023
        %v1058 = vmul.f32 %v512, %v1023
        %v1059 = vmul.f32 %v513, %v1023
        %v1060 = vmul.f32 %v514, %v1023
        %v1061 = vmul.f32 %v515, %v1023
        %v1062 = vmul.f32 %v516, %v1023
        %v1063 = vmul.f32 %v517, %v1023
        %v1064 = vmul.f32 %v518, %v1023
        %v1065 = vmul.f32 %v519, %v1023
        %v1066 = vmul.f32 %v520, %v1023
        %v1067 = vmul.f32 %v521, %v1023
        %v1068 = vmul.f32 %v522, %v1023
        %v1069 = vmul.f32 %v523, %v1023
        %v1070 = vmul.f32 %v524, %v1023
        %v1071 = vmul.f32 %v525, %v1023
        %v1072 = vmul.f32 %v526, %v1023
        %v1073 = vmul.f32 %v527, %v1023
        %v1074 = vmul.f32 %v528, %v1023
        %v1075 = vmul.f32 %v529, %v1023
        %v1076 = vmul.f32 %v530, %v1023
        %v1077 = vmul.f32 %v531, %v1023
        %v1078 = vmul.f32 %v532, %v1023
        %v1079 = vmul.f32 %v533, %v1023
        %v1080 = vmul.f32 %v534, %v1023
        %v1081 = vmul.f32 %v535, %v1023
        %v1082 = vmul.f32 %v536, %v1023
        %v1083 = vmul.f32 %v537, %v1023
        %v1084 = vmul.f32 %v538, %v1023
        %v1085 = vmul.f32 %v539, %v1023
        %v1086 = vmul.f32 %v540, %v1023
        %v1087 = vmul.f32 %v541, %v1023
        %v1088 = vadd.f32 %v956, %v1024
        %v1089 = vadd.f32 %v957, %v1025
        %v1090 = vadd.f32 %v958, %v1026
        %v1091 = vadd.f32 %v959, %v1027
        %v1092 = vadd.f32 %v960, %v1028
        %v1093 = vadd.f32 %v961, %v1029
        %v1094 = vadd.f32 %v962, %v1030
        %v1095 = vadd.f32 %v963, %v1031
        %v1096 = vadd.f32 %v964, %v1032
        %v1097 = vadd.f32 %v965, %v1033
        %v1098 = vadd.f32 %v966, %v1034
        %v1099 = vadd.f32 %v967, %v1035
        %v1100 = vadd.f32 %v968, %v1036
        %v1101 = vadd.f32 %v969, %v1037
        %v1102 = vadd.f32 %v970, %v1038
        %v1103 = vadd.f32 %v971, %v1039
        %v1104 = vadd.f32 %v972, %v1040
        %v1105 = vadd.f32 %v973, %v1041
        %v1106 = vadd.f32 %v974, %v1042
        %v1107 = vadd.f32 %v975, %v1043
        %v1108 = vadd.f32 %v976, %v1044
        %v1109 = vadd.f32 %v977, %v1045
        %v1110 = vadd.f32 %v978, %v1046
        %v1111 = vadd.f32 %v979, %v1047
        %v1112 = vadd.f32 %v980, %v1048
        %v1113 = vadd.f32 %v981, %v1049
        %v1114 = vadd.f32 %v982, %v1050
        %v1115 = vadd.f32 %v983, %v1051
        %v1116 = vadd.f32 %v984, %v1052
        %v1117 = vadd.f32 %v985, %v1053
        %v1118 = vadd.f32 %v986, %v1054
        %v1119 = vadd.f32 %v987, %v1055
        %v1120 = vadd.f32 %v988, %v1056
        %v1121 = vadd.f32 %v989, %v1057
        %v1122 = vadd.f32 %v990, %v1058
        %v1123 = vadd.f32 %v991, %v1059
        %v1124 = vadd.f32 %v992, %v1060
        %v1125 = vadd.f32 %v993, %v1061
        %v1126 = vadd.f32 %v994, %v1062
        %v1127 = vadd.f32 %v995, %v1063
        %v1128 = vadd.f32 %v996, %v1064
        %v1129 = vadd.f32 %v997, %v1065
        %v1130 = vadd.f32 %v998, %v1066
        %v1131 = vadd.f32 %v999, %v1067
        %v1132 = vadd.f32 %v1000, %v1068
        %v1133 = vadd.f32 %v1001, %v1069
        %v1134 = vadd.f32 %v1002, %v1070
        %v1135 = vadd.f32 %v1003, %v1071
        %v1136 = vadd.f32 %v1004, %v1072
        %v1137 = vadd.f32 %v1005, %v1073
        %v1138 = vadd.f32 %v1006, %v1074
        %v1139 = vadd.f32 %v1007, %v1075
        %v1140 = vadd.f32 %v1008, %v1076
        %v1141 = vadd.f32 %v1009, %v1077
        %v1142 = vadd.f32 %v1010, %v1078
        %v1143 = vadd.f32 %v1011, %v1079
        %v1144 = vadd.f32 %v1012, %v1080
        %v1145 = vadd.f32 %v1013, %v1081
        %v1146 = vadd.f32 %v1014, %v1082
        %v1147 = vadd.f32 %v1015, %v1083
        %v1148 = vadd.f32 %v1016, %v1084
        %v1149 = vadd.f32 %v1017, %v1085
        %v1150 = vadd.f32 %v1018, %v1086
        %v1151 = vadd.f32 %v1019, %v1087
        %v1152 = vlaneseq
        %v1153 = vshrl.u32 %v1152, 7
        %v1154 = vsub.s32 1, %v1153
        %v1155 = vrot.slane %v469, %v1154
        %v1156 = vmul.f32 %v546, %v1155
        %v1157 = vmul.f32 %v547, %v1155
        %v1158 = vmul.f32 %v548, %v1155
        %v1159 = vmul.f32 %v549, %v1155
        %v1160 = vmul.f32 %v550, %v1155
        %v1161 = vmul.f32 %v551, %v1155
        %v1162 = vmul.f32 %v552, %v1155
        %v1163 = vmul.f32 %v553, %v1155
        %v1164 = vmul.f32 %v554, %v1155
        %v1165 = vmul.f32 %v555, %v1155
        %v1166 = vmul.f32 %v556, %v1155
        %v1167 = vmul.f32 %v557, %v1155
        %v1168 = vmul.f32 %v558, %v1155
        %v1169 = vmul.f32 %v559, %v1155
        %v1170 = vmul.f32 %v560, %v1155
        %v1171 = vmul.f32 %v561, %v1155
        %v1172 = vmul.f32 %v562, %v1155
        %v1173 = vmul.f32 %v563, %v1155
        %v1174 = vmul.f32 %v564, %v1155
        %v1175 = vmul.f32 %v565, %v1155
        %v1176 = vmul.f32 %v566, %v1155
        %v1177 = vmul.f32 %v567, %v1155
        %v1178 = vmul.f32 %v568, %v1155
        %v1179 = vmul.f32 %v569, %v1155
        %v1180 = vmul.f32 %v570, %v1155
        %v1181 = vmul.f32 %v571, %v1155
        %v1182 = vmul.f32 %v572, %v1155
        %v1183 = vmul.f32 %v573, %v1155
        %v1184 = vmul.f32 %v574, %v1155
        %v1185 = vmul.f32 %v575, %v1155
        %v1186 = vmul.f32 %v576, %v1155
        %v1187 = vmul.f32 %v577, %v1155
        %v1188 = vmul.f32 %v582, %v1155
        %v1189 = vmul.f32 %v583, %v1155
        %v1190 = vmul.f32 %v584, %v1155
        %v1191 = vmul.f32 %v585, %v1155
        %v1192 = vmul.f32 %v586, %v1155
        %v1193 = vmul.f32 %v587, %v1155
        %v1194 = vmul.f32 %v588, %v1155
        %v1195 = vmul.f32 %v589, %v1155
        %v1196 = vmul.f32 %v590, %v1155
        %v1197 = vmul.f32 %v591, %v1155
        %v1198 = vmul.f32 %v592, %v1155
        %v1199 = vmul.f32 %v593, %v1155
        %v1200 = vmul.f32 %v594, %v1155
        %v1201 = vmul.f32 %v595, %v1155
        %v1202 = vmul.f32 %v596, %v1155
        %v1203 = vmul.f32 %v597, %v1155
        %v1204 = vmul.f32 %v598, %v1155
        %v1205 = vmul.f32 %v599, %v1155
        %v1206 = vmul.f32 %v600, %v1155
        %v1207 = vmul.f32 %v601, %v1155
        %v1208 = vmul.f32 %v602, %v1155
        %v1209 = vmul.f32 %v603, %v1155
        %v1210 = vmul.f32 %v604, %v1155
        %v1211 = vmul.f32 %v605, %v1155
        %v1212 = vmul.f32 %v606, %v1155
        %v1213 = vmul.f32 %v607, %v1155
        %v1214 = vmul.f32 %v608, %v1155
        %v1215 = vmul.f32 %v609, %v1155
        %v1216 = vmul.f32 %v610, %v1155
        %v1217 = vmul.f32 %v611, %v1155
        %v1218 = vmul.f32 %v612, %v1155
        %v1219 = vmul.f32 %v613, %v1155
        %v1220 = vadd.f32 %v1088, %v1156
        %v1221 = vadd.f32 %v1089, %v1157
        %v1222 = vadd.f32 %v1090, %v1158
        %v1223 = vadd.f32 %v1091, %v1159
        %v1224 = vadd.f32 %v1092, %v1160
        %v1225 = vadd.f32 %v1093, %v1161
        %v1226 = vadd.f32 %v1094, %v1162
        %v1227 = vadd.f32 %v1095, %v1163
        %v1228 = vadd.f32 %v1096, %v1164
        %v1229 = vadd.f32 %v1097, %v1165
        %v1230 = vadd.f32 %v1098, %v1166
        %v1231 = vadd.f32 %v1099, %v1167
        %v1232 = vadd.f32 %v1100, %v1168
        %v1233 = vadd.f32 %v1101, %v1169
        %v1234 = vadd.f32 %v1102, %v1170
        %v1235 = vadd.f32 %v1103, %v1171
        %v1236 = vadd.f32 %v1104, %v1172
        %v1237 = vadd.f32 %v1105, %v1173
        %v1238 = vadd.f32 %v1106, %v1174
        %v1239 = vadd.f32 %v1107, %v1175
        %v1240 = vadd.f32 %v1108, %v1176
        %v1241 = vadd.f32 %v1109, %v1177
        %v1242 = vadd.f32 %v1110, %v1178
        %v1243 = vadd.f32 %v1111, %v1179
        %v1244 = vadd.f32 %v1112, %v1180
        %v1245 = vadd.f32 %v1113, %v1181
        %v1246 = vadd.f32 %v1114, %v1182
        %v1247 = vadd.f32 %v1115, %v1183
        %v1248 = vadd.f32 %v1116, %v1184
        %v1249 = vadd.f32 %v1117, %v1185
        %v1250 = vadd.f32 %v1118, %v1186
        %v1251 = vadd.f32 %v1119, %v1187
        %v1252 = vadd.f32 %v1120, %v1188
        %v1253 = vadd.f32 %v1121, %v1189
        %v1254 = vadd.f32 %v1122, %v1190
        %v1255 = vadd.f32 %v1123, %v1191
        %v1256 = vadd.f32 %v1124, %v1192
        %v1257 = vadd.f32 %v1125, %v1193
        %v1258 = vadd.f32 %v1126, %v1194
        %v1259 = vadd.f32 %v1127, %v1195
        %v1260 = vadd.f32 %v1128, %v1196
        %v1261 = vadd.f32 %v1129, %v1197
        %v1262 = vadd.f32 %v1130, %v1198
        %v1263 = vadd.f32 %v1131, %v1199
        %v1264 = vadd.f32 %v1132, %v1200
        %v1265 = vadd.f32 %v1133, %v1201
        %v1266 = vadd.f32 %v1134, %v1202
        %v1267 = vadd.f32 %v1135, %v1203
        %v1268 = vadd.f32 %v1136, %v1204
        %v1269 = vadd.f32 %v1137, %v1205
        %v1270 = vadd.f32 %v1138, %v1206
        %v1271 = vadd.f32 %v1139, %v1207
        %v1272 = vadd.f32 %v1140, %v1208
        %v1273 = vadd.f32 %v1141, %v1209
        %v1274 = vadd.f32 %v1142, %v1210
        %v1275 = vadd.f32 %v1143, %v1211
        %v1276 = vadd.f32 %v1144, %v1212
        %v1277 = vadd.f32 %v1145, %v1213
        %v1278 = vadd.f32 %v1146, %v1214
        %v1279 = vadd.f32 %v1147, %v1215
        %v1280 = vadd.f32 %v1148, %v1216
        %v1281 = vadd.f32 %v1149, %v1217
        %v1282 = vadd.f32 %v1150, %v1218
        %v1283 = vadd.f32 %v1151, %v1219
        %v1284 = vlaneseq
        %v1285 = vshrl.u32 %v1284, 7
        %v1286 = vsub.s32 2, %v1285
        %v1287 = vrot.slane %v469, %v1286
        %v1288 = vmul.f32 %v618, %v1287
        %v1289 = vmul.f32 %v619, %v1287
        %v1290 = vmul.f32 %v620, %v1287
        %v1291 = vmul.f32 %v621, %v1287
        %v1292 = vmul.f32 %v622, %v1287
        %v1293 = vmul.f32 %v623, %v1287
        %v1294 = vmul.f32 %v624, %v1287
        %v1295 = vmul.f32 %v625, %v1287
        %v1296 = vmul.f32 %v626, %v1287
        %v1297 = vmul.f32 %v627, %v1287
        %v1298 = vmul.f32 %v628, %v1287
        %v1299 = vmul.f32 %v629, %v1287
        %v1300 = vmul.f32 %v630, %v1287
        %v1301 = vmul.f32 %v631, %v1287
        %v1302 = vmul.f32 %v632, %v1287
        %v1303 = vmul.f32 %v633, %v1287
        %v1304 = vmul.f32 %v634, %v1287
        %v1305 = vmul.f32 %v635, %v1287
        %v1306 = vmul.f32 %v636, %v1287
        %v1307 = vmul.f32 %v637, %v1287
        %v1308 = vmul.f32 %v638, %v1287
        %v1309 = vmul.f32 %v639, %v1287
        %v1310 = vmul.f32 %v640, %v1287
        %v1311 = vmul.f32 %v641, %v1287
        %v1312 = vmul.f32 %v642, %v1287
        %v1313 = vmul.f32 %v643, %v1287
        %v1314 = vmul.f32 %v644, %v1287
        %v1315 = vmul.f32 %v645, %v1287
        %v1316 = vmul.f32 %v646, %v1287
        %v1317 = vmul.f32 %v647, %v1287
        %v1318 = vmul.f32 %v648, %v1287
        %v1319 = vmul.f32 %v649, %v1287
        %v1320 = vmul.f32 %v654, %v1287
        %v1321 = vmul.f32 %v655, %v1287
        %v1322 = vmul.f32 %v656, %v1287
        %v1323 = vmul.f32 %v657, %v1287
        %v1324 = vmul.f32 %v658, %v1287
        %v1325 = vmul.f32 %v659, %v1287
        %v1326 = vmul.f32 %v660, %v1287
        %v1327 = vmul.f32 %v661, %v1287
        %v1328 = vmul.f32 %v662, %v1287
        %v1329 = vmul.f32 %v663, %v1287
        %v1330 = vmul.f32 %v664, %v1287
        %v1331 = vmul.f32 %v665, %v1287
        %v1332 = vmul.f32 %v666, %v1287
        %v1333 = vmul.f32 %v667, %v1287
        %v1334 = vmul.f32 %v668, %v1287
        %v1335 = vmul.f32 %v669, %v1287
        %v1336 = vmul.f32 %v670, %v1287
        %v1337 = vmul.f32 %v671, %v1287
        %v1338 = vmul.f32 %v672, %v1287
        %v1339 = vmul.f32 %v673, %v1287
        %v1340 = vmul.f32 %v674, %v1287
        %v1341 = vmul.f32 %v675, %v1287
        %v1342 = vmul.f32 %v676, %v1287
        %v1343 = vmul.f32 %v677, %v1287
        %v1344 = vmul.f32 %v678, %v1287
        %v1345 = vmul.f32 %v679, %v1287
        %v1346 = vmul.f32 %v680, %v1287
        %v1347 = vmul.f32 %v681, %v1287
        %v1348 = vmul.f32 %v682, %v1287
        %v1349 = vmul.f32 %v683, %v1287
        %v1350 = vmul.f32 %v684, %v1287
        %v1351 = vmul.f32 %v685, %v1287
        %v1352 = vadd.f32 %v1220, %v1288
        %v1353 = vadd.f32 %v1221, %v1289
        %v1354 = vadd.f32 %v1222, %v1290
        %v1355 = vadd.f32 %v1223, %v1291
        %v1356 = vadd.f32 %v1224, %v1292
        %v1357 = vadd.f32 %v1225, %v1293
        %v1358 = vadd.f32 %v1226, %v1294
        %v1359 = vadd.f32 %v1227, %v1295
        %v1360 = vadd.f32 %v1228, %v1296
        %v1361 = vadd.f32 %v1229, %v1297
        %v1362 = vadd.f32 %v1230, %v1298
        %v1363 = vadd.f32 %v1231, %v1299
        %v1364 = vadd.f32 %v1232, %v1300
        %v1365 = vadd.f32 %v1233, %v1301
        %v1366 = vadd.f32 %v1234, %v1302
        %v1367 = vadd.f32 %v1235, %v1303
        %v1368 = vadd.f32 %v1236, %v1304
        %v1369 = vadd.f32 %v1237, %v1305
        %v1370 = vadd.f32 %v1238, %v1306
        %v1371 = vadd.f32 %v1239, %v1307
        %v1372 = vadd.f32 %v1240, %v1308
        %v1373 = vadd.f32 %v1241, %v1309
        %v1374 = vadd.f32 %v1242, %v1310
        %v1375 = vadd.f32 %v1243, %v1311
        %v1376 = vadd.f32 %v1244, %v1312
        %v1377 = vadd.f32 %v1245, %v1313
        %v1378 = vadd.f32 %v1246, %v1314
        %v1379 = vadd.f32 %v1247, %v1315
        %v1380 = vadd.f32 %v1248, %v1316
        %v1381 = vadd.f32 %v1249, %v1317
        %v1382 = vadd.f32 %v1250, %v1318
        %v1383 = vadd.f32 %v1251, %v1319
        %v1384 = vadd.f32 %v1252, %v1320
        %v1385 = vadd.f32 %v1253, %v1321
        %v1386 = vadd.f32 %v1254, %v1322
        %v1387 = vadd.f32 %v1255, %v1323
        %v1388 = vadd.f32 %v1256, %v1324
        %v1389 = vadd.f32 %v1257, %v1325
        %v1390 = vadd.f32 %v1258, %v1326
        %v1391 = vadd.f32 %v1259, %v1327
        %v1392 = vadd.f32 %v1260, %v1328
        %v1393 = vadd.f32 %v1261, %v1329
        %v1394 = vadd.f32 %v1262, %v1330
        %v1395 = vadd.f32 %v1263, %v1331
        %v1396 = vadd.f32 %v1264, %v1332
        %v1397 = vadd.f32 %v1265, %v1333
        %v1398 = vadd.f32 %v1266, %v1334
        %v1399 = vadd.f32 %v1267, %v1335
        %v1400 = vadd.f32 %v1268, %v1336
        %v1401 = vadd.f32 %v1269, %v1337
        %v1402 = vadd.f32 %v1270, %v1338
        %v1403 = vadd.f32 %v1271, %v1339
        %v1404 = vadd.f32 %v1272, %v1340
        %v1405 = vadd.f32 %v1273, %v1341
        %v1406 = vadd.f32 %v1274, %v1342
        %v1407 = vadd.f32 %v1275, %v1343
        %v1408 = vadd.f32 %v1276, %v1344
        %v1409 = vadd.f32 %v1277, %v1345
        %v1410 = vadd.f32 %v1278, %v1346
        %v1411 = vadd.f32 %v1279, %v1347
        %v1412 = vadd.f32 %v1280, %v1348
        %v1413 = vadd.f32 %v1281, %v1349
        %v1414 = vadd.f32 %v1282, %v1350
        %v1415 = vadd.f32 %v1283, %v1351
        %v1416 = vlaneseq
        %v1417 = vshrl.u32 %v1416, 7
        %v1418 = vsub.s32 0, %v1417
        %v1419 = vrot.slane %v470, %v1418
        %v1420 = vmul.f32 %v476, %v1419
        %v1421 = vmul.f32 %v477, %v1419
        %v1422 = vmul.f32 %v478, %v1419
        %v1423 = vmul.f32 %v479, %v1419
        %v1424 = vmul.f32 %v480, %v1419
        %v1425 = vmul.f32 %v481, %v1419
        %v1426 = vmul.f32 %v482, %v1419
        %v1427 = vmul.f32 %v483, %v1419
        %v1428 = vmul.f32 %v484, %v1419
        %v1429 = vmul.f32 %v485, %v1419
        %v1430 = vmul.f32 %v486, %v1419
        %v1431 = vmul.f32 %v487, %v1419
        %v1432 = vmul.f32 %v488, %v1419
        %v1433 = vmul.f32 %v489, %v1419
        %v1434 = vmul.f32 %v490, %v1419
        %v1435 = vmul.f32 %v491, %v1419
        %v1436 = vmul.f32 %v492, %v1419
        %v1437 = vmul.f32 %v493, %v1419
        %v1438 = vmul.f32 %v494, %v1419
        %v1439 = vmul.f32 %v495, %v1419
        %v1440 = vmul.f32 %v496, %v1419
        %v1441 = vmul.f32 %v497, %v1419
        %v1442 = vmul.f32 %v498, %v1419
        %v1443 = vmul.f32 %v499, %v1419
        %v1444 = vmul.f32 %v500, %v1419
        %v1445 = vmul.f32 %v501, %v1419
        %v1446 = vmul.f32 %v502, %v1419
        %v1447 = vmul.f32 %v503, %v1419
        %v1448 = vmul.f32 %v504, %v1419
        %v1449 = vmul.f32 %v505, %v1419
        %v1450 = vmul.f32 %v506, %v1419
        %v1451 = vmul.f32 %v507, %v1419
        %v1452 = vmul.f32 %v512, %v1419
        %v1453 = vmul.f32 %v513, %v1419
        %v1454 = vmul.f32 %v514, %v1419
        %v1455 = vmul.f32 %v515, %v1419
        %v1456 = vmul.f32 %v516, %v1419
        %v1457 = vmul.f32 %v517, %v1419
        %v1458 = vmul.f32 %v518, %v1419
        %v1459 = vmul.f32 %v519, %v1419
        %v1460 = vmul.f32 %v520, %v1419
        %v1461 = vmul.f32 %v521, %v1419
        %v1462 = vmul.f32 %v522, %v1419
        %v1463 = vmul.f32 %v523, %v1419
        %v1464 = vmul.f32 %v524, %v1419
        %v1465 = vmul.f32 %v525, %v1419
        %v1466 = vmul.f32 %v526, %v1419
        %v1467 = vmul.f32 %v527, %v1419
        %v1468 = vmul.f32 %v528, %v1419
        %v1469 = vmul.f32 %v529, %v1419
        %v1470 = vmul.f32 %v530, %v1419
        %v1471 = vmul.f32 %v531, %v1419
        %v1472 = vmul.f32 %v532, %v1419
        %v1473 = vmul.f32 %v533, %v1419
        %v1474 = vmul.f32 %v534, %v1419
        %v1475 = vmul.f32 %v535, %v1419
        %v1476 = vmul.f32 %v536, %v1419
        %v1477 = vmul.f32 %v537, %v1419
        %v1478 = vmul.f32 %v538, %v1419
        %v1479 = vmul.f32 %v539, %v1419
        %v1480 = vmul.f32 %v540, %v1419
        %v1481 = vmul.f32 %v541, %v1419
        %v1482 = vmul.f32 %v542, %v1419
        %v1483 = vmul.f32 %v543, %v1419
        %v1484 = vadd.f32 %v1352, %v1420
        %v1485 = vadd.f32 %v1353, %v1421
        %v1486 = vadd.f32 %v1354, %v1422
        %v1487 = vadd.f32 %v1355, %v1423
        %v1488 = vadd.f32 %v1356, %v1424
        %v1489 = vadd.f32 %v1357, %v1425
        %v1490 = vadd.f32 %v1358, %v1426
        %v1491 = vadd.f32 %v1359, %v1427
        %v1492 = vadd.f32 %v1360, %v1428
        %v1493 = vadd.f32 %v1361, %v1429
        %v1494 = vadd.f32 %v1362, %v1430
        %v1495 = vadd.f32 %v1363, %v1431
        %v1496 = vadd.f32 %v1364, %v1432
        %v1497 = vadd.f32 %v1365, %v1433
        %v1498 = vadd.f32 %v1366, %v1434
        %v1499 = vadd.f32 %v1367, %v1435
        %v1500 = vadd.f32 %v1368, %v1436
        %v1501 = vadd.f32 %v1369, %v1437
        %v1502 = vadd.f32 %v1370, %v1438
        %v1503 = vadd.f32 %v1371, %v1439
        %v1504 = vadd.f32 %v1372, %v1440
        %v1505 = vadd.f32 %v1373, %v1441
        %v1506 = vadd.f32 %v1374, %v1442
        %v1507 = vadd.f32 %v1375, %v1443
        %v1508 = vadd.f32 %v1376, %v1444
        %v1509 = vadd.f32 %v1377, %v1445
        %v1510 = vadd.f32 %v1378, %v1446
        %v1511 = vadd.f32 %v1379, %v1447
        %v1512 = vadd.f32 %v1380, %v1448
        %v1513 = vadd.f32 %v1381, %v1449
        %v1514 = vadd.f32 %v1382, %v1450
        %v1515 = vadd.f32 %v1383, %v1451
        %v1516 = vadd.f32 %v1384, %v1452
        %v1517 = vadd.f32 %v1385, %v1453
        %v1518 = vadd.f32 %v1386, %v1454
        %v1519 = vadd.f32 %v1387, %v1455
        %v1520 = vadd.f32 %v1388, %v1456
        %v1521 = vadd.f32 %v1389, %v1457
        %v1522 = vadd.f32 %v1390, %v1458
        %v1523 = vadd.f32 %v1391, %v1459
        %v1524 = vadd.f32 %v1392, %v1460
        %v1525 = vadd.f32 %v1393, %v1461
        %v1526 = vadd.f32 %v1394, %v1462
        %v1527 = vadd.f32 %v1395, %v1463
        %v1528 = vadd.f32 %v1396, %v1464
        %v1529 = vadd.f32 %v1397, %v1465
        %v1530 = vadd.f32 %v1398, %v1466
        %v1531 = vadd.f32 %v1399, %v1467
        %v1532 = vadd.f32 %v1400, %v1468
        %v1533 = vadd.f32 %v1401, %v1469
        %v1534 = vadd.f32 %v1402, %v1470
        %v1535 = vadd.f32 %v1403, %v1471
        %v1536 = vadd.f32 %v1404, %v1472
        %v1537 = vadd.f32 %v1405, %v1473
        %v1538 = vadd.f32 %v1406, %v1474
        %v1539 = vadd.f32 %v1407, %v1475
        %v1540 = vadd.f32 %v1408, %v1476
        %v1541 = vadd.f32 %v1409, %v1477
        %v1542 = vadd.f32 %v1410, %v1478
        %v1543 = vadd.f32 %v1411, %v1479
        %v1544 = vadd.f32 %v1412, %v1480
        %v1545 = vadd.f32 %v1413, %v1481
        %v1546 = vadd.f32 %v1414, %v1482
        %v1547 = vadd.f32 %v1415, %v1483
        %v1548 = vlaneseq
        %v1549 = vshrl.u32 %v1548, 7
        %v1550 = vsub.s32 1, %v1549
        %v1551 = vrot.slane %v470, %v1550
        %v1552 = vmul.f32 %v548, %v1551
        %v1553 = vmul.f32 %v549, %v1551
        %v1554 = vmul.f32 %v550, %v1551
        %v1555 = vmul.f32 %v551, %v1551
        %v1556 = vmul.f32 %v552, %v1551
        %v1557 = vmul.f32 %v553, %v1551
        %v1558 = vmul.f32 %v554, %v1551
        %v1559 = vmul.f32 %v555, %v1551
        %v1560 = vmul.f32 %v556, %v1551
        %v1561 = vmul.f32 %v557, %v1551
        %v1562 = vmul.f32 %v558, %v1551
        %v1563 = vmul.f32 %v559, %v1551
        %v1564 = vmul.f32 %v560, %v1551
        %v1565 = vmul.f32 %v561, %v1551
        %v1566 = vmul.f32 %v562, %v1551
        %v1567 = vmul.f32 %v563, %v1551
        %v1568 = vmul.f32 %v564, %v1551
        %v1569 = vmul.f32 %v565, %v1551
        %v1570 = vmul.f32 %v566, %v1551
        %v1571 = vmul.f32 %v567, %v1551
        %v1572 = vmul.f32 %v568, %v1551
        %v1573 = vmul.f32 %v569, %v1551
        %v1574 = vmul.f32 %v570, %v1551
        %v1575 = vmul.f32 %v571, %v1551
        %v1576 = vmul.f32 %v572, %v1551
        %v1577 = vmul.f32 %v573, %v1551
        %v1578 = vmul.f32 %v574, %v1551
        %v1579 = vmul.f32 %v575, %v1551
        %v1580 = vmul.f32 %v576, %v1551
        %v1581 = vmul.f32 %v577, %v1551
        %v1582 = vmul.f32 %v578, %v1551
        %v1583 = vmul.f32 %v579, %v1551
        %v1584 = vmul.f32 %v584, %v1551
        %v1585 = vmul.f32 %v585, %v1551
        %v1586 = vmul.f32 %v586, %v1551
        %v1587 = vmul.f32 %v587, %v1551
        %v1588 = vmul.f32 %v588, %v1551
        %v1589 = vmul.f32 %v589, %v1551
        %v1590 = vmul.f32 %v590, %v1551
        %v1591 = vmul.f32 %v591, %v1551
        %v1592 = vmul.f32 %v592, %v1551
        %v1593 = vmul.f32 %v593, %v1551
        %v1594 = vmul.f32 %v594, %v1551
        %v1595 = vmul.f32 %v595, %v1551
        %v1596 = vmul.f32 %v596, %v1551
        %v1597 = vmul.f32 %v597, %v1551
        %v1598 = vmul.f32 %v598, %v1551
        %v1599 = vmul.f32 %v599, %v1551
        %v1600 = vmul.f32 %v600, %v1551
        %v1601 = vmul.f32 %v601, %v1551
        %v1602 = vmul.f32 %v602, %v1551
        %v1603 = vmul.f32 %v603, %v1551
        %v1604 = vmul.f32 %v604, %v1551
        %v1605 = vmul.f32 %v605, %v1551
        %v1606 = vmul.f32 %v606, %v1551
        %v1607 = vmul.f32 %v607, %v1551
        %v1608 = vmul.f32 %v608, %v1551
        %v1609 = vmul.f32 %v609, %v1551
        %v1610 = vmul.f32 %v610, %v1551
        %v1611 = vmul.f32 %v611, %v1551
        %v1612 = vmul.f32 %v612, %v1551
        %v1613 = vmul.f32 %v613, %v1551
        %v1614 = vmul.f32 %v614, %v1551
        %v1615 = vmul.f32 %v615, %v1551
        %v1616 = vadd.f32 %v1484, %v1552
        %v1617 = vadd.f32 %v1485, %v1553
        %v1618 = vadd.f32 %v1486, %v1554
        %v1619 = vadd.f32 %v1487, %v1555
        %v1620 = vadd.f32 %v1488, %v1556
        %v1621 = vadd.f32 %v1489, %v1557
        %v1622 = vadd.f32 %v1490, %v1558
        %v1623 = vadd.f32 %v1491, %v1559
        %v1624 = vadd.f32 %v1492, %v1560
        %v1625 = vadd.f32 %v1493, %v1561
        %v1626 = vadd.f32 %v1494, %v1562
        %v1627 = vadd.f32 %v1495, %v1563
        %v1628 = vadd.f32 %v1496, %v1564
        %v1629 = vadd.f32 %v1497, %v1565
        %v1630 = vadd.f32 %v1498, %v1566
        %v1631 = vadd.f32 %v1499, %v1567
        %v1632 = vadd.f32 %v1500, %v1568
        %v1633 = vadd.f32 %v1501, %v1569
        %v1634 = vadd.f32 %v1502, %v1570
        %v1635 = vadd.f32 %v1503, %v1571
        %v1636 = vadd.f32 %v1504, %v1572
        %v1637 = vadd.f32 %v1505, %v1573
        %v1638 = vadd.f32 %v1506, %v1574
        %v1639 = vadd.f32 %v1507, %v1575
        %v1640 = vadd.f32 %v1508, %v1576
        %v1641 = vadd.f32 %v1509, %v1577
        %v1642 = vadd.f32 %v1510, %v1578
        %v1643 = vadd.f32 %v1511, %v1579
        %v1644 = vadd.f32 %v1512, %v1580
        %v1645 = vadd.f32 %v1513, %v1581
        %v1646 = vadd.f32 %v1514, %v1582
        %v1647 = vadd.f32 %v1515, %v1583
        %v1648 = vadd.f32 %v1516, %v1584
        %v1649 = vadd.f32 %v1517, %v1585
        %v1650 = vadd.f32 %v1518, %v1586
        %v1651 = vadd.f32 %v1519, %v1587
        %v1652 = vadd.f32 %v1520, %v1588
        %v1653 = vadd.f32 %v1521, %v1589
        %v1654 = vadd.f32 %v1522, %v1590
        %v1655 = vadd.f32 %v1523, %v1591
        %v1656 = vadd.f32 %v1524, %v1592
        %v1657 = vadd.f32 %v1525, %v1593
        %v1658 = vadd.f32 %v1526, %v1594
        %v1659 = vadd.f32 %v1527, %v1595
        %v1660 = vadd.f32 %v1528, %v1596
        %v1661 = vadd.f32 %v1529, %v1597
        %v1662 = vadd.f32 %v1530, %v1598
        %v1663 = vadd.f32 %v1531, %v1599
        %v1664 = vadd.f32 %v1532, %v1600
        %v1665 = vadd.f32 %v1533, %v1601
        %v1666 = vadd.f32 %v1534, %v1602
        %v1667 = vadd.f32 %v1535, %v1603
        %v1668 = vadd.f32 %v1536, %v1604
        %v1669 = vadd.f32 %v1537, %v1605
        %v1670 = vadd.f32 %v1538, %v1606
        %v1671 = vadd.f32 %v1539, %v1607
        %v1672 = vadd.f32 %v1540, %v1608
        %v1673 = vadd.f32 %v1541, %v1609
        %v1674 = vadd.f32 %v1542, %v1610
        %v1675 = vadd.f32 %v1543, %v1611
        %v1676 = vadd.f32 %v1544, %v1612
        %v1677 = vadd.f32 %v1545, %v1613
        %v1678 = vadd.f32 %v1546, %v1614
        %v1679 = vadd.f32 %v1547, %v1615
        %v1680 = vlaneseq
        %v1681 = vshrl.u32 %v1680, 7
        %v1682 = vsub.s32 2, %v1681
        %v1683 = vrot.slane %v470, %v1682
        %v1684 = vmul.f32 %v620, %v1683
        %v1685 = vmul.f32 %v621, %v1683
        %v1686 = vmul.f32 %v622, %v1683
        %v1687 = vmul.f32 %v623, %v1683
        %v1688 = vmul.f32 %v624, %v1683
        %v1689 = vmul.f32 %v625, %v1683
        %v1690 = vmul.f32 %v626, %v1683
        %v1691 = vmul.f32 %v627, %v1683
        %v1692 = vmul.f32 %v628, %v1683
        %v1693 = vmul.f32 %v629, %v1683
        %v1694 = vmul.f32 %v630, %v1683
        %v1695 = vmul.f32 %v631, %v1683
        %v1696 = vmul.f32 %v632, %v1683
        %v1697 = vmul.f32 %v633, %v1683
        %v1698 = vmul.f32 %v634, %v1683
        %v1699 = vmul.f32 %v635, %v1683
        %v1700 = vmul.f32 %v636, %v1683
        %v1701 = vmul.f32 %v637, %v1683
        %v1702 = vmul.f32 %v638, %v1683
        %v1703 = vmul.f32 %v639, %v1683
        %v1704 = vmul.f32 %v640, %v1683
        %v1705 = vmul.f32 %v641, %v1683
        %v1706 = vmul.f32 %v642, %v1683
        %v1707 = vmul.f32 %v643, %v1683
        %v1708 = vmul.f32 %v644, %v1683
        %v1709 = vmul.f32 %v645, %v1683
        %v1710 = vmul.f32 %v646, %v1683
        %v1711 = vmul.f32 %v647, %v1683
        %v1712 = vmul.f32 %v648, %v1683
        %v1713 = vmul.f32 %v649, %v1683
        %v1714 = vmul.f32 %v650, %v1683
        %v1715 = vmul.f32 %v651, %v1683
        %v1716 = vmul.f32 %v656, %v1683
        %v1717 = vmul.f32 %v657, %v1683
        %v1718 = vmul.f32 %v658, %v1683
        %v1719 = vmul.f32 %v659, %v1683
        %v1720 = vmul.f32 %v660, %v1683
        %v1721 = vmul.f32 %v661, %v1683
        %v1722 = vmul.f32 %v662, %v1683
        %v1723 = vmul.f32 %v663, %v1683
        %v1724 = vmul.f32 %v664, %v1683
        %v1725 = vmul.f32 %v665, %v1683
        %v1726 = vmul.f32 %v666, %v1683
        %v1727 = vmul.f32 %v667, %v1683
        %v1728 = vmul.f32 %v668, %v1683
        %v1729 = vmul.f32 %v669, %v1683
        %v1730 = vmul.f32 %v670, %v1683
        %v1731 = vmul.f32 %v671, %v1683
        %v1732 = vmul.f32 %v672, %v1683
        %v1733 = vmul.f32 %v673, %v1683
        %v1734 = vmul.f32 %v674, %v1683
        %v1735 = vmul.f32 %v675, %v1683
        %v1736 = vmul.f32 %v676, %v1683
        %v1737 = vmul.f32 %v677, %v1683
        %v1738 = vmul.f32 %v678, %v1683
        %v1739 = vmul.f32 %v679, %v1683
        %v1740 = vmul.f32 %v680, %v1683
        %v1741 = vmul.f32 %v681, %v1683
        %v1742 = vmul.f32 %v682, %v1683
        %v1743 = vmul.f32 %v683, %v1683
        %v1744 = vmul.f32 %v684, %v1683
        %v1745 = vmul.f32 %v685, %v1683
        %v1746 = vmul.f32 %v686, %v1683
        %v1747 = vmul.f32 %v687, %v1683
        %v1748 = vadd.f32 %v1616, %v1684
        %v1749 = vadd.f32 %v1617, %v1685
        %v1750 = vadd.f32 %v1618, %v1686
        %v1751 = vadd.f32 %v1619, %v1687
        %v1752 = vadd.f32 %v1620, %v1688
        %v1753 = vadd.f32 %v1621, %v1689
        %v1754 = vadd.f32 %v1622, %v1690
        %v1755 = vadd.f32 %v1623, %v1691
        %v1756 = vadd.f32 %v1624, %v1692
        %v1757 = vadd.f32 %v1625, %v1693
        %v1758 = vadd.f32 %v1626, %v1694
        %v1759 = vadd.f32 %v1627, %v1695
        %v1760 = vadd.f32 %v1628, %v1696
        %v1761 = vadd.f32 %v1629, %v1697
        %v1762 = vadd.f32 %v1630, %v1698
        %v1763 = vadd.f32 %v1631, %v1699
        %v1764 = vadd.f32 %v1632, %v1700
        %v1765 = vadd.f32 %v1633, %v1701
        %v1766 = vadd.f32 %v1634, %v1702
        %v1767 = vadd.f32 %v1635, %v1703
        %v1768 = vadd.f32 %v1636, %v1704
        %v1769 = vadd.f32 %v1637, %v1705
        %v1770 = vadd.f32 %v1638, %v1706
        %v1771 = vadd.f32 %v1639, %v1707
        %v1772 = vadd.f32 %v1640, %v1708
        %v1773 = vadd.f32 %v1641, %v1709
        %v1774 = vadd.f32 %v1642, %v1710
        %v1775 = vadd.f32 %v1643, %v1711
        %v1776 = vadd.f32 %v1644, %v1712
        %v1777 = vadd.f32 %v1645, %v1713
        %v1778 = vadd.f32 %v1646, %v1714
        %v1779 = vadd.f32 %v1647, %v1715
        %v1780 = vadd.f32 %v1648, %v1716
        %v1781 = vadd.f32 %v1649, %v1717
        %v1782 = vadd.f32 %v1650, %v1718
        %v1783 = vadd.f32 %v1651, %v1719
        %v1784 = vadd.f32 %v1652, %v1720
        %v1785 = vadd.f32 %v1653, %v1721
        %v1786 = vadd.f32 %v1654, %v1722
        %v1787 = vadd.f32 %v1655, %v1723
        %v1788 = vadd.f32 %v1656, %v1724
        %v1789 = vadd.f32 %v1657, %v1725
        %v1790 = vadd.f32 %v1658, %v1726
        %v1791 = vadd.f32 %v1659, %v1727
        %v1792 = vadd.f32 %v1660, %v1728
        %v1793 = vadd.f32 %v1661, %v1729
        %v1794 = vadd.f32 %v1662, %v1730
        %v1795 = vadd.f32 %v1663, %v1731
        %v1796 = vadd.f32 %v1664, %v1732
        %v1797 = vadd.f32 %v1665, %v1733
        %v1798 = vadd.f32 %v1666, %v1734
        %v1799 = vadd.f32 %v1667, %v1735
        %v1800 = vadd.f32 %v1668, %v1736
        %v1801 = vadd.f32 %v1669, %v1737
        %v1802 = vadd.f32 %v1670, %v1738
        %v1803 = vadd.f32 %v1671, %v1739
        %v1804 = vadd.f32 %v1672, %v1740
        %v1805 = vadd.f32 %v1673, %v1741
        %v1806 = vadd.f32 %v1674, %v1742
        %v1807 = vadd.f32 %v1675, %v1743
        %v1808 = vadd.f32 %v1676, %v1744
        %v1809 = vadd.f32 %v1677, %v1745
        %v1810 = vadd.f32 %v1678, %v1746
        %v1811 = vadd.f32 %v1679, %v1747
        %v1813 = vlaneseq
        %v1814 = vshrl.u32 %v1813, 7
        %v1815 = vsub.s32 0, %v1814
        %v1816 = vrot.slane %v471, %v1815
        %v1818 = vadd.f32 %v1748, %v1816
        %v1819 = vadd.f32 %v1749, %v1816
        %v1820 = vadd.f32 %v1750, %v1816
        %v1821 = vadd.f32 %v1751, %v1816
        %v1822 = vadd.f32 %v1752, %v1816
        %v1823 = vadd.f32 %v1753, %v1816
        %v1824 = vadd.f32 %v1754, %v1816
        %v1825 = vadd.f32 %v1755, %v1816
        %v1826 = vadd.f32 %v1756, %v1816
        %v1827 = vadd.f32 %v1757, %v1816
        %v1828 = vadd.f32 %v1758, %v1816
        %v1829 = vadd.f32 %v1759, %v1816
        %v1830 = vadd.f32 %v1760, %v1816
        %v1831 = vadd.f32 %v1761, %v1816
        %v1832 = vadd.f32 %v1762, %v1816
        %v1833 = vadd.f32 %v1763, %v1816
        %v1834 = vadd.f32 %v1764, %v1816
        %v1835 = vadd.f32 %v1765, %v1816
        %v1836 = vadd.f32 %v1766, %v1816
        %v1837 = vadd.f32 %v1767, %v1816
        %v1838 = vadd.f32 %v1768, %v1816
        %v1839 = vadd.f32 %v1769, %v1816
        %v1840 = vadd.f32 %v1770, %v1816
        %v1841 = vadd.f32 %v1771, %v1816
        %v1842 = vadd.f32 %v1772, %v1816
        %v1843 = vadd.f32 %v1773, %v1816
        %v1844 = vadd.f32 %v1774, %v1816
        %v1845 = vadd.f32 %v1775, %v1816
        %v1846 = vadd.f32 %v1776, %v1816
        %v1847 = vadd.f32 %v1777, %v1816
        %v1848 = vadd.f32 %v1778, %v1816
        %v1849 = vadd.f32 %v1779, %v1816
        %v1850 = vadd.f32 %v1780, %v1816
        %v1851 = vadd.f32 %v1781, %v1816
        %v1852 = vadd.f32 %v1782, %v1816
        %v1853 = vadd.f32 %v1783, %v1816
        %v1854 = vadd.f32 %v1784, %v1816
        %v1855 = vadd.f32 %v1785, %v1816
        %v1856 = vadd.f32 %v1786, %v1816
        %v1857 = vadd.f32 %v1787, %v1816
        %v1858 = vadd.f32 %v1788, %v1816
        %v1859 = vadd.f32 %v1789, %v1816
        %v1860 = vadd.f32 %v1790, %v1816
        %v1861 = vadd.f32 %v1791, %v1816
        %v1862 = vadd.f32 %v1792, %v1816
        %v1863 = vadd.f32 %v1793, %v1816
        %v1864 = vadd.f32 %v1794, %v1816
        %v1865 = vadd.f32 %v1795, %v1816
        %v1866 = vadd.f32 %v1796, %v1816
        %v1867 = vadd.f32 %v1797, %v1816
        %v1868 = vadd.f32 %v1798, %v1816
        %v1869 = vadd.f32 %v1799, %v1816
        %v1870 = vadd.f32 %v1800, %v1816
        %v1871 = vadd.f32 %v1801, %v1816
        %v1872 = vadd.f32 %v1802, %v1816
        %v1873 = vadd.f32 %v1803, %v1816
        %v1874 = vadd.f32 %v1804, %v1816
        %v1875 = vadd.f32 %v1805, %v1816
        %v1876 = vadd.f32 %v1806, %v1816
        %v1877 = vadd.f32 %v1807, %v1816
        %v1878 = vadd.f32 %v1808, %v1816
        %v1879 = vadd.f32 %v1809, %v1816
        %v1880 = vadd.f32 %v1810, %v1816
        %v1881 = vadd.f32 %v1811, %v1816
        %v1882 = vld [vmem:[%s3] sm:$0xff]
        %v1883 = vld [vmem:[%s4] sm:$0xff]
        %1885 = vset.pattern.permute.xlu0 0
        %1886 = vperm.xlu0 %1885, %v1883
        %v1887 = vpop.permute.xlu0 %1886
        %v1890 = vsel %vm229, %v1882, 0
        %v1893 = vsel %vm229, %v1818, 0
        %v1896 = vsel %vm229, %v1819, 0
        %v1899 = vsel %vm229, %v1820, 0
        %v1902 = vsel %vm229, %v1821, 0
        %v1905 = vsel %vm229, %v1822, 0
        %v1908 = vsel %vm229, %v1823, 0
        %v1911 = vsel %vm229, %v1824, 0
        %v1914 = vsel %vm229, %v1825, 0
        %v1917 = vsel %vm229, %v1826, 0
        %v1920 = vsel %vm229, %v1827, 0
        %v1923 = vsel %vm229, %v1828, 0
        %v1926 = vsel %vm229, %v1829, 0
        %v1929 = vsel %vm229, %v1830, 0
        %v1932 = vsel %vm229, %v1831, 0
        %v1935 = vsel %vm229, %v1832, 0
        %v1938 = vsel %vm229, %v1833, 0
        %v1941 = vsel %vm229, %v1834, 0
        %v1944 = vsel %vm229, %v1835, 0
        %v1947 = vsel %vm229, %v1836, 0
        %v1950 = vsel %vm229, %v1837, 0
        %v1953 = vsel %vm229, %v1838, 0
        %v1956 = vsel %vm229, %v1839, 0
        %v1959 = vsel %vm229, %v1840, 0
        %v1962 = vsel %vm229, %v1841, 0
        %v1965 = vsel %vm229, %v1842, 0
        %v1968 = vsel %vm229, %v1843, 0
        %v1971 = vsel %vm229, %v1844, 0
        %v1974 = vsel %vm229, %v1845, 0
        %v1977 = vsel %vm229, %v1846, 0
        %v1980 = vsel %vm229, %v1847, 0
        %v1983 = vsel %vm229, %v1848, 0
        %v1986 = vsel %vm229, %v1849, 0
        %v1989 = vsel %vm229, %v1850, 0
        %v1992 = vsel %vm229, %v1851, 0
        %v1995 = vsel %vm229, %v1852, 0
        %v1998 = vsel %vm229, %v1853, 0
        %v2001 = vsel %vm229, %v1854, 0
        %v2004 = vsel %vm229, %v1855, 0
        %v2007 = vsel %vm229, %v1856, 0
        %v2010 = vsel %vm229, %v1857, 0
        %v2013 = vsel %vm229, %v1858, 0
        %v2016 = vsel %vm229, %v1859, 0
        %v2019 = vsel %vm229, %v1860, 0
        %v2022 = vsel %vm229, %v1861, 0
        %v2025 = vsel %vm229, %v1862, 0
        %v2028 = vsel %vm229, %v1863, 0
        %v2031 = vsel %vm229, %v1864, 0
        %v2034 = vsel %vm229, %v1865, 0
        %v2037 = vsel %vm229, %v1866, 0
        %v2040 = vsel %vm229, %v1867, 0
        %v2043 = vsel %vm229, %v1868, 0
        %v2046 = vsel %vm229, %v1869, 0
        %v2049 = vsel %vm229, %v1870, 0
        %v2052 = vsel %vm229, %v1871, 0
        %v2055 = vsel %vm229, %v1872, 0
        %v2058 = vsel %vm229, %v1873, 0
        %v2061 = vsel %vm229, %v1874, 0
        %v2064 = vsel %vm229, %v1875, 0
        %v2067 = vsel %vm229, %v1876, 0
        %v2070 = vsel %vm229, %v1877, 0
        %v2073 = vsel %vm229, %v1878, 0
        %v2076 = vsel %vm229, %v1879, 0
        %v2079 = vsel %vm229, %v1880, 0
        %v2082 = vsel %vm229, %v1881, 0
        %2084 = vmatprep.subr.mxu0 0.0
        %2085 = vmatpush1.xpose.msra.mxu0 %v1893
        %2086 = vmatprep.subr.mxu0 0.0
        %2087 = vmatpush1.xpose.msra.mxu0 %v1896
        %2088 = vmatprep.subr.mxu0 0.0
        %2089 = vmatpush1.xpose.msra.mxu0 %v1899
        %2090 = vmatprep.subr.mxu0 0.0
        %2091 = vmatpush1.xpose.msra.mxu0 %v1902
        %2092 = vmatprep.subr.mxu0 0.0
        %2093 = vmatpush1.xpose.msra.mxu0 %v1905
        %2094 = vmatprep.subr.mxu0 0.0
        %2095 = vmatpush1.xpose.msra.mxu0 %v1908
        %2096 = vmatprep.subr.mxu0 0.0
        %2097 = vmatpush1.xpose.msra.mxu0 %v1911
        %2098 = vmatprep.subr.mxu0 0.0
        %2099 = vmatpush1.xpose.msra.mxu0 %v1914
        %2100 = vmatprep.subr.mxu0 0.0
        %2101 = vmatpush1.xpose.msra.mxu0 %v1917
        %2102 = vmatprep.subr.mxu0 0.0
        %2103 = vmatpush1.xpose.msra.mxu0 %v1920
        %2104 = vmatprep.subr.mxu0 0.0
        %2105 = vmatpush1.xpose.msra.mxu0 %v1923
        %2106 = vmatprep.subr.mxu0 0.0
        %2107 = vmatpush1.xpose.msra.mxu0 %v1926
        %2108 = vmatprep.subr.mxu0 0.0
        %2109 = vmatpush1.xpose.msra.mxu0 %v1929
        %2110 = vmatprep.subr.mxu0 0.0
        %2111 = vmatpush1.xpose.msra.mxu0 %v1932
        %2112 = vmatprep.subr.mxu0 0.0
        %2113 = vmatpush1.xpose.msra.mxu0 %v1935
        %2114 = vmatprep.subr.mxu0 0.0
        %2115 = vmatpush1.xpose.msra.mxu0 %v1938
        %2116 = vmatprep.subr.mxu0 0.0
        %2117 = vmatpush1.xpose.msra.mxu0 %v1941
        %2118 = vmatprep.subr.mxu0 0.0
        %2119 = vmatpush1.xpose.msra.mxu0 %v1944
        %2120 = vmatprep.subr.mxu0 0.0
        %2121 = vmatpush1.xpose.msra.mxu0 %v1947
        %2122 = vmatprep.subr.mxu0 0.0
        %2123 = vmatpush1.xpose.msra.mxu0 %v1950
        %2124 = vmatprep.subr.mxu0 0.0
        %2125 = vmatpush1.xpose.msra.mxu0 %v1953
        %2126 = vmatprep.subr.mxu0 0.0
        %2127 = vmatpush1.xpose.msra.mxu0 %v1956
        %2128 = vmatprep.subr.mxu0 0.0
        %2129 = vmatpush1.xpose.msra.mxu0 %v1959
        %2130 = vmatprep.subr.mxu0 0.0
        %2131 = vmatpush1.xpose.msra.mxu0 %v1962
        %2132 = vmatprep.subr.mxu0 0.0
        %2133 = vmatpush1.xpose.msra.mxu0 %v1965
        %2134 = vmatprep.subr.mxu0 0.0
        %2135 = vmatpush1.xpose.msra.mxu0 %v1968
        %2136 = vmatprep.subr.mxu0 0.0
        %2137 = vmatpush1.xpose.msra.mxu0 %v1971
        %2138 = vmatprep.subr.mxu0 0.0
        %2139 = vmatpush1.xpose.msra.mxu0 %v1974
        %2140 = vmatprep.subr.mxu0 0.0
        %2141 = vmatpush1.xpose.msra.mxu0 %v1977
        %2142 = vmatprep.subr.mxu0 0.0
        %2143 = vmatpush1.xpose.msra.mxu0 %v1980
        %2144 = vmatprep.subr.mxu0 0.0
        %2145 = vmatpush1.xpose.msra.mxu0 %v1983
        %2146 = vmatprep.subr.mxu0 0.0
        %2147 = vmatpush1.xpose.msra.mxu0 %v1986
        %2148 = vmatprep.mubr.f32.mxu0 0.0
        %2149 = vmatmul.mubr.f32.gmra.mrb[0].mxu0 %v1890
        %v2150 = vpop.f32.mrb[0].mxu0
        %v2151 = vadd.f32 %v1887, %v2150
        %v2152 = vpop.f32.mrb[0].mxu0
        %v2153 = vadd.f32 %v1887, %v2152
        %2154 = vdwg.mxu0
        %2155 = vmatprep.subr.mxu0 0.0
        %2156 = vmatpush1.xpose.msra.mxu0 %v1989
        %2157 = vmatprep.subr.mxu0 0.0
        %2158 = vmatpush1.xpose.msra.mxu0 %v1992
        %2159 = vmatprep.subr.mxu0 0.0
        %2160 = vmatpush1.xpose.msra.mxu0 %v1995
        %2161 = vmatprep.subr.mxu0 0.0
        %2162 = vmatpush1.xpose.msra.mxu0 %v1998
        %2163 = vmatprep.subr.mxu0 0.0
        %2164 = vmatpush1.xpose.msra.mxu0 %v2001
        %2165 = vmatprep.subr.mxu0 0.0
        %2166 = vmatpush1.xpose.msra.mxu0 %v2004
        %2167 = vmatprep.subr.mxu0 0.0
        %2168 = vmatpush1.xpose.msra.mxu0 %v2007
        %2169 = vmatprep.subr.mxu0 0.0
        %2170 = vmatpush1.xpose.msra.mxu0 %v2010
        %2171 = vmatprep.subr.mxu0 0.0
        %2172 = vmatpush1.xpose.msra.mxu0 %v2013
        %2173 = vmatprep.subr.mxu0 0.0
        %2174 = vmatpush1.xpose.msra.mxu0 %v2016
        %2175 = vmatprep.subr.mxu0 0.0
        %2176 = vmatpush1.xpose.msra.mxu0 %v2019
        %2177 = vmatprep.subr.mxu0 0.0
        %2178 = vmatpush1.xpose.msra.mxu0 %v2022
        %2179 = vmatprep.subr.mxu0 0.0
        %2180 = vmatpush1.xpose.msra.mxu0 %v2025
        %2181 = vmatprep.subr.mxu0 0.0
        %2182 = vmatpush1.xpose.msra.mxu0 %v2028
        %2183 = vmatprep.subr.mxu0 0.0
        %2184 = vmatpush1.xpose.msra.mxu0 %v2031
        %2185 = vmatprep.subr.mxu0 0.0
        %2186 = vmatpush1.xpose.msra.mxu0 %v2034
        %2187 = vmatprep.subr.mxu0 0.0
        %2188 = vmatpush1.xpose.msra.mxu0 %v2037
        %2189 = vmatprep.subr.mxu0 0.0
        %2190 = vmatpush1.xpose.msra.mxu0 %v2040
        %2191 = vmatprep.subr.mxu0 0.0
        %2192 = vmatpush1.xpose.msra.mxu0 %v2043
        %2193 = vmatprep.subr.mxu0 0.0
        %2194 = vmatpush1.xpose.msra.mxu0 %v2046
        %2195 = vmatprep.subr.mxu0 0.0
        %2196 = vmatpush1.xpose.msra.mxu0 %v2049
        %2197 = vmatprep.subr.mxu0 0.0
        %2198 = vmatpush1.xpose.msra.mxu0 %v2052
        %2199 = vmatprep.subr.mxu0 0.0
        %2200 = vmatpush1.xpose.msra.mxu0 %v2055
        %2201 = vmatprep.subr.mxu0 0.0
        %2202 = vmatpush1.xpose.msra.mxu0 %v2058
        %2203 = vmatprep.subr.mxu0 0.0
        %2204 = vmatpush1.xpose.msra.mxu0 %v2061
        %2205 = vmatprep.subr.mxu0 0.0
        %2206 = vmatpush1.xpose.msra.mxu0 %v2064
        %2207 = vmatprep.subr.mxu0 0.0
        %2208 = vmatpush1.xpose.msra.mxu0 %v2067
        %2209 = vmatprep.subr.mxu0 0.0
        %2210 = vmatpush1.xpose.msra.mxu0 %v2070
        %2211 = vmatprep.subr.mxu0 0.0
        %2212 = vmatpush1.xpose.msra.mxu0 %v2073
        %2213 = vmatprep.subr.mxu0 0.0
        %2214 = vmatpush1.xpose.msra.mxu0 %v2076
        %2215 = vmatprep.subr.mxu0 0.0
        %2216 = vmatpush1.xpose.msra.mxu0 %v2079
        %2217 = vmatprep.subr.mxu0 0.0
        %2218 = vmatpush1.xpose.msra.mxu0 %v2082
        %2219 = vmatprep.mubr.f32.mxu0 0.0
        %2220 = vmatmul.mubr.f32.gmra.mrb[0].mxu0 %v1890
        %v2221 = vpop.f32.mrb[0].mxu0
        %v2222 = vadd.f32 %v1887, %v2221
        %v2223 = vpop.f32.mrb[0].mxu0
        %v2224 = vadd.f32 %v1887, %v2223
        %2225 = vdwg.mxu0
        %2226 = vst [vmem:[%s220] sm:$0xff] %v2151
        %2227 = vst [vmem:[%s220 + $0x8] sm:$0xff] %v2153
        %2228 = vst [vmem:[%s220 + $0x10] sm:$0xff] %v2222
        %2229 = vst [vmem:[%s220 + $0x18] sm:$0xff] %v2224
        %s2230 = sand.u32 %s137, 1
        %s2231 = scalar_lea.sflag [#allocation4], %s2230
        %s2232 = sand.u32 %s137, 1
        %s2233 = smul.addr %s2232, 32
        %s2234 = scalar_lea.vmem [#allocation3], %s2233
        // Predicated region
        $region41: #{tpu_custom_call.1} parent=39 // pred_check
          %p2235 = pneg %p147
        $region42: #{tpu_custom_call.1} parent=39 // pred_check_branch
          %2237 = sbr.rel (%p2235) target = $region44
        $region43: #{tpu_custom_call.1} parent=39 // pred_region
          %s2238 = smul.u32 4, %s19
          %s2240 = ssub.s32 512, 512
          %2241 = vsyncadd %s2231, %s2240
          %s2242 = smul.addr %s2238, 128
          %s2243 = scalar_lea.hbm %s5, %s2242
          %s2245 = sshll.u32 %s2234, 4
          %s2246 = int_to_ptr.vmem [resolvable:$true] %s2245
          %2248 = dma.vmem_to_hbm [thread:$0]  %s2246, 512, %s2243, %s2231
        $region44: #{tpu_custom_call.1} parent=39 // pred_fallthru
          _
      $region40: #{tpu_custom_call.1} parent=5 // pred_fallthru
        _
      %p2249 = scmp.le.s32.totalorder 2, %s14
      // Predicated region
      $region45: #{tpu_custom_call.1} parent=5 // pred_check
        %p2250 = pneg %p2249
      $region46: #{tpu_custom_call.1} parent=5 // pred_check_branch
        %2252 = sbr.rel (%p2250) target = $region48
      $region47: #{tpu_custom_call.1} parent=5 // pred_region
        %s2253 = ssub.s32 %s14, 2
        // Predicated region
        $region49: #{tpu_custom_call.1} parent=47 // pred_check
          %p2254 = pneg %p153
        $region50: #{tpu_custom_call.1} parent=47 // pred_check_branch
          %2256 = sbr.rel (%p2254) target = $region52
        $region51: #{tpu_custom_call.1} parent=47 // pred_region
          %s2257 = sand.u32 %s138, 1
          %s2258 = scalar_lea.sflag [#allocation4], %s2257
          %s2259 = sand.u32 %s138, 1
          %s2260 = smul.addr %s2259, 32
          %s2261 = scalar_lea.vmem [#allocation3], %s2260
          %2262 = dma.done %s2258, 512
        $region52: #{tpu_custom_call.1} parent=47 // pred_fallthru
          _
      $region48: #{tpu_custom_call.1} parent=5 // pred_fallthru
        _
    $region6: #{tpu_custom_call.1} parent=1 // loop_footer
      %s18 = sadd.s32 1, %s14
    $region7: #{tpu_custom_call.1} parent=1 // loop_footer_branch
      %13 = sbr.rel target = $region3
    $region8: #{tpu_custom_call.1} parent=1 // loop_exit
      _
    %2263 = vsyncpa [#allocation4], 1
    %s2264 = scalar_lea.sflag [#allocation4], 1
    %2265 = vsyncpa %s2264, 1

</llo_original>
